<compile_context>
chip_gen: v7x
topology: tpu7x:2x2x1
jax: 0.10.0
libtpu: 0.0.40
codegen_flags: <defaults>
</compile_context>

<pallas_src>
import math

import jax
import jax.numpy as jnp
from jax.experimental import pallas as pl
from jax.experimental.pallas import tpu as pltpu


_LANE = 128
_STREAM_VMEM_BUDGET = 16 * 1024 * 1024   # double-buffered in+out streams (bytes)
_VMEM_LIMIT_BYTES = 32 * 1024 * 1024     # explicit scoped-VMEM limit (safe v5e/v6e/v7x)
_MAX_LANE_WIDTH = 8192                   # widest packed row we stream
_MIN_PALLAS_BYTES = 256 * 1024           # below this, plain XLA beats a pallas_call


def _bn_scale_shift_kernel(y_ref, s_ref, b_ref, x_ref):
    """x = y * s + b, (1, C) params broadcast over the (TB, C) tile."""
    y = y_ref[...].astype(jnp.float32)
    x_ref[...] = (y * s_ref[...] + b_ref[...]).astype(x_ref.dtype)


def _choose_lane_width(total, d, max_c=_MAX_LANE_WIDTH):
    """Largest C <= max_c with C % lcm(d, 128) == 0 and total % C == 0, else None."""
    base = d // math.gcd(d, _LANE) * _LANE          # lcm(d, 128)
    if base > max_c or total % base != 0:
        return None
    best = base
    k = 2
    while k * base <= max_c:
        if total % (k * base) == 0:
            best = k * base
        k += 1
    return best


def batchnorm_forward(y, log_gamma, beta, running_mean, running_var, eps=1e-5):
    """Pallas implementation of BatchNorm.forward (eval mode)."""
    N, D = y.shape
    out_dtype = y.dtype
    in_bytes = jnp.dtype(y.dtype).itemsize

    # ---- fold per-feature params once, in f32 (tiny (D,) work) -------------
    lg32 = log_gamma.astype(jnp.float32)
    beta32 = beta.astype(jnp.float32)
    mean32 = running_mean.astype(jnp.float32)
    var32 = running_var.astype(jnp.float32)

    std = jnp.sqrt(var32 + eps)
    s = jnp.exp(-lg32) * std                      # (D,)
    b = mean32 - beta32 * s                       # (D,)
    ladj_row = 0.5 * jnp.log(var32 + eps) - lg32  # (D,)

    # expand_as(y): constant along batch -> lazy broadcast (no kernel HBM write).
    ladj = jnp.broadcast_to(ladj_row.reshape(1, D), (N, D))

    # ---- small-input bypass -------------------------------------------------
    if N * D * in_bytes < _MIN_PALLAS_BYTES:
        x = (y.astype(jnp.float32) * s.reshape(1, D)
             + b.reshape(1, D)).astype(out_dtype)
        return x, ladj

    # ---- pick a lane-dense layout (wide, unmasked 128-lane stores) ----------
    C = _choose_lane_width(N * D, D)
    if C is not None:
        d_pad = D
        y_flat = y
        s_row, b_row = s, b
    else:
        # Pad features to the next multiple of 128; padded lanes compute 0 and
        # are sliced off below.  Removes masked vst.msk partial stores.
        d_pad = pl.cdiv(D, _LANE) * _LANE
        pad = d_pad - D
        y_flat = jnp.pad(y, ((0, 0), (0, pad)))
        s_row = jnp.pad(s, (0, pad))
        b_row = jnp.pad(b, (0, pad))
        C = _choose_lane_width(N * d_pad, d_pad)
        if C is None:               # feature dim wider than our cap: full rows
            C = d_pad

    rep = C // d_pad
    R = (N * d_pad) // C
    y2 = y_flat.reshape(R, C)
    s2 = jnp.tile(s_row, rep).reshape(1, C)
    b2 = jnp.tile(b_row, rep).reshape(1, C)

    # ---- block size from a VMEM byte budget ---------------------------------
    out_bytes = in_bytes
    pack = max(1, 4 // in_bytes)          # elements per 32-bit word
    sublane = 8 * pack                    # 8 f32 / 16 bf16 / 32 int8
    row_bytes = C * (in_bytes + out_bytes)
    tb = max(1, _STREAM_VMEM_BUDGET // (2 * row_bytes))   # 2 pipeline buffers/stream
    if tb >= R:
        TB = R                            # full-dim block: any R is legal
        grid = (1,)
    else:
        TB = min(R, max(sublane, (tb // sublane) * sublane))
        grid = (pl.cdiv(R, TB),)

    # ---- grid-axis semantics: engage both TensorCores on v7x ----------------
    semantics = ("parallel",)
    try:
        kind = jax.devices()[0].device_kind.lower()
    except Exception:  # pragma: no cover - defensive
        kind = ""
    if (("v7" in kind) or ("tpu7" in kind)) and grid[0] >= 2 and \
            hasattr(pltpu, "CORE_PARALLEL"):
        semantics = (pltpu.CORE_PARALLEL,)

    x2 = pl.pallas_call(
        _bn_scale_shift_kernel,
        out_shape=jax.ShapeDtypeStruct((R, C), out_dtype),
        grid=grid,
        in_specs=[
            pl.BlockSpec((TB, C), lambda i: (i, 0)),   # streamed y tile
            pl.BlockSpec((1, C), lambda i: (0, 0)),    # folded scale
            pl.BlockSpec((1, C), lambda i: (0, 0)),    # folded shift
        ],
        out_specs=pl.BlockSpec((TB, C), lambda i: (i, 0)),
        compiler_params=pltpu.CompilerParams(
            dimension_semantics=semantics,
            vmem_limit_bytes=_VMEM_LIMIT_BYTES,
        ),
    )(y2, s2, b2)

    x_pad = x2.reshape(N, d_pad)
    x = x_pad[:, :D] if d_pad != D else x_pad
    return x, ladj


def _reference_forward(y, log_gamma, beta, running_mean, running_var, eps=1e-5):
    x_hat = (y - beta) * jnp.exp(-log_gamma)
    x = x_hat * jnp.sqrt(running_var + eps) + running_mean
    ladj = 0.5 * jnp.log(running_var + eps) - log_gamma
    return x, jnp.broadcast_to(ladj, y.shape)


if __name__ == "__main__":
    key = jax.random.PRNGKey(0)

    # (name, batch, input_size) — exercises bypass, packed, padded (D=97, not a
    # divisor/multiple of 128) and multi-step-grid paths respectively.
    cases = [
        ("bypass", 8, 32),
        ("packed", 8192, 32),
        ("padded", 2048, 97),
        ("multistep", 65536, 32),
    ]

    for name, batch, input_size in cases:
        key, k_y, k_lg, k_b, k_m, k_v = jax.random.split(key, 6)
        y = jax.random.normal(k_y, (batch, input_size), dtype=jnp.float32)
        log_gamma = 0.1 * jax.random.normal(k_lg, (input_size,), dtype=jnp.float32)
        beta = 0.1 * jax.random.normal(k_b, (input_size,), dtype=jnp.float32)
        running_mean = 0.05 * jax.random.normal(k_m, (input_size,), dtype=jnp.float32)
        running_var = 1.0 + 0.1 * jax.nn.softplus(
            jax.random.normal(k_v, (input_size,), dtype=jnp.float32))

        x, ladj = batchnorm_forward(y, log_gamma, beta, running_mean, running_var)
        jax.block_until_ready((x, ladj))

        x_ref, ladj_ref = _reference_forward(y, log_gamma, beta, running_mean,
                                             running_var)
        assert x.shape == (batch, input_size), name
        assert ladj.shape == (batch, input_size), name
        assert jnp.allclose(x, x_ref, atol=1e-5, rtol=1e-5), name
        assert jnp.allclose(ladj, ladj_ref, atol=1e-5, rtol=1e-5), name

    print("KERNEL_OK")
</pallas_src>

<mosaic_0001>
module attributes {stable_mosaic.version = 11 : i64} {
  func.func @_bn_scale_shift_kernel(%arg0: i32, %arg1: memref<32x8192xf32, #tpu.memory_space<vmem>>, %arg2: memref<1x8192xf32, #tpu.memory_space<vmem>>, %arg3: memref<1x8192xf32, #tpu.memory_space<vmem>>, %arg4: memref<32x8192xf32, #tpu.memory_space<vmem>>) attributes {dimension_semantics = [#tpu.dimension_semantics<parallel>], iteration_bounds = array<i64: 1>, scalar_prefetch = 0 : i64, scratch_operands = 0 : i64, tpu.core_type = #tpu.core_type<tc>, window_params = [{transform_indices = @transform_0, window_bounds = array<i64: 32, 8192>}, {pipeline_mode = #tpu.pipeline_mode<synchronous>, transform_indices = @transform_1, window_bounds = array<i64: 1, 8192>}, {pipeline_mode = #tpu.pipeline_mode<synchronous>, transform_indices = @transform_2, window_bounds = array<i64: 1, 8192>}, {transform_indices = @transform_3, window_bounds = array<i64: 32, 8192>}]} {
    %c0 = arith.constant 0 : index
    %c0_0 = arith.constant 0 : index
    %0 = vector.load %arg1[%c0, %c0_0] : memref<32x8192xf32, #tpu.memory_space<vmem>>, vector<32x8192xf32>
    %c0_1 = arith.constant 0 : index
    %c0_2 = arith.constant 0 : index
    %1 = vector.load %arg2[%c0_1, %c0_2] : memref<1x8192xf32, #tpu.memory_space<vmem>>, vector<1x8192xf32>
    %2 = vector.broadcast %1 : vector<1x8192xf32> to vector<32x8192xf32>
    %3 = arith.mulf %0, %2 : vector<32x8192xf32>
    %c0_3 = arith.constant 0 : index
    %c0_4 = arith.constant 0 : index
    %4 = vector.load %arg3[%c0_3, %c0_4] : memref<1x8192xf32, #tpu.memory_space<vmem>>, vector<1x8192xf32>
    %5 = vector.broadcast %4 : vector<1x8192xf32> to vector<32x8192xf32>
    %6 = arith.addf %3, %5 : vector<32x8192xf32>
    %c0_5 = arith.constant 0 : index
    %c0_6 = arith.constant 0 : index
    %7 = vector.load %arg4[%c0_5, %c0_6] : memref<32x8192xf32, #tpu.memory_space<vmem>>, vector<32x8192xf32>
    tpu.vector_store %arg4[%c0_5, %c0_6], %6 {strides = array<i32>} : memref<32x8192xf32, #tpu.memory_space<vmem>>, vector<32x8192xf32>,
    return
  }
  func.func @transform_0(%arg0: i32) -> (i32, i32) {
    %c0_i32 = arith.constant 0 : i32
    %c0_i32_0 = arith.constant 0 : i32
    return %arg0, %c0_i32 : i32, i32
  }
  func.func @transform_1(%arg0: i32) -> (i32, i32) {
    %c0_i32 = arith.constant 0 : i32
    %c0_i32_0 = arith.constant 0 : i32
    %c0_i32_1 = arith.constant 0 : i32
    return %c0_i32, %c0_i32_0 : i32, i32
  }
  func.func @transform_2(%arg0: i32) -> (i32, i32) {
    %c0_i32 = arith.constant 0 : i32
    %c0_i32_0 = arith.constant 0 : i32
    %c0_i32_1 = arith.constant 0 : i32
    return %c0_i32, %c0_i32_0 : i32, i32
  }
  func.func @transform_3(%arg0: i32) -> (i32, i32) {
    %c0_i32 = arith.constant 0 : i32
    %c0_i32_0 = arith.constant 0 : i32
    return %arg0, %c0_i32 : i32, i32
  }
}

</mosaic_0001>

<llo_original>
// kernel: tpu_custom_call.1
$region0: #{tpu_custom_call.1}
  #allocation0 [shape = 'u32[]', space=smem, size = 0x4, offset = 0x4, fixed_abs, tag = 'smem constant byte address 0x4 - core index']
  #allocation1 [shape = 'u32[144,128]{1,0:T(1,128)}', space=vmem, size = 0x12000, scoped, tag = 'internal scratch']
  %s0 = inlined_call_operand.hbm [shape: f32[32,8192], index: 0, kind: input, shape index: {}]
  %s1 = inlined_call_operand.hbm [shape: f32[1,8192], index: 1, kind: input, shape index: {}]
  %s2 = inlined_call_operand.hbm [shape: f32[1,8192], index: 2, kind: input, shape index: {}]
  %s3 = inlined_call_operand.hbm [shape: f32[32,8192], index: 3, kind: output, shape index: {}]
  %s4 = sld [smem:[#allocation0]]
  $region34: #{tpu_custom_call.1} parent=0
    _
  %s6 = ssub.s32 1, %s4
  %s7 = scalar_select 0, %s6, %s4
  $region1: #{tpu_custom_call.1} parent=0
    #allocation2 [shape = 'u8[1048576]{0}', space=vmem, size = 0x100000, scoped, tag = 'input window, operand 0, single buffered']
    #allocation3 [shape = 's32[1]{0}', space=sflag, size = 0x4, scoped, tag = 'scoped memory for tpu_custom_call.1']
    #allocation4 [shape = 's32[1]{0}', space=sflag, size = 0x4, scoped, tag = 'scoped memory for tpu_custom_call.1']
    #allocation5 [shape = 'u8[32768]{0}', space=vmem, size = 0x8000, scoped, tag = 'input window, operand 1, single buffered']
    #allocation6 [shape = 's32[1]{0}', space=sflag, size = 0x4, scoped, tag = 'scoped memory for tpu_custom_call.1']
    #allocation7 [shape = 'u8[32768]{0}', space=vmem, size = 0x8000, scoped, tag = 'input window, operand 2, single buffered']
    #allocation8 [shape = 'u8[1048576]{0}', space=vmem, size = 0x100000, scoped, tag = 'output window, operand 0, single buffered']
    %8 = vsyncpa [#allocation3], 0
    %9 = vsyncpa [#allocation6], 0
    %10 = vsyncpa [#allocation4], 0
    // Predicated region
    $region2: #{tpu_custom_call.1} parent=1 // pred_check
      _
    $region3: #{tpu_custom_call.1} parent=1 // pred_check_branch
      %12 = sbr.rel (0) target = $region5
    $region4: #{tpu_custom_call.1} parent=1 // pred_region
      %s14 = ssub.s32 32768, 32768
      %15 = vsyncadd [#allocation3], %s14
      %s16 = sshll.u32 [#allocation2], 4
      %s17 = int_to_ptr.vmem [resolvable:$true] %s16
      %22 = dma.hbm_to_vmem [thread:$0]  %s0, 32768, %s17, [#allocation3], 8192, 8192, 512
    $region5: #{tpu_custom_call.1} parent=1 // pred_fallthru
      _
    // Predicated region
    $region6: #{tpu_custom_call.1} parent=1 // pred_check
      _
    $region7: #{tpu_custom_call.1} parent=1 // pred_check_branch
      %24 = sbr.rel (0) target = $region9
    $region8: #{tpu_custom_call.1} parent=1 // pred_region
      %s26 = ssub.s32 1024, 1024
      %27 = vsyncadd [#allocation6], %s26
      %s29 = sshll.u32 [#allocation5], 4
      %s30 = int_to_ptr.vmem [resolvable:$true] %s29
      %32 = dma.hbm_to_vmem [thread:$0]  %s1, 1024, %s30, [#allocation6]
    $region9: #{tpu_custom_call.1} parent=1 // pred_fallthru
      _
    // Predicated region
    $region10: #{tpu_custom_call.1} parent=1 // pred_check
      _
    $region11: #{tpu_custom_call.1} parent=1 // pred_check_branch
      %34 = sbr.rel (0) target = $region13
    $region12: #{tpu_custom_call.1} parent=1 // pred_region
      %s36 = ssub.s32 1024, 1024
      %37 = vsyncadd [#allocation6], %s36
      %s39 = sshll.u32 [#allocation7], 4
      %s40 = int_to_ptr.vmem [resolvable:$true] %s39
      %42 = dma.hbm_to_vmem [thread:$0]  %s2, 1024, %s40, [#allocation6]
    $region13: #{tpu_custom_call.1} parent=1 // pred_fallthru
      _
    // Predicated region
    $region14: #{tpu_custom_call.1} parent=1 // pred_check
      _
    $region15: #{tpu_custom_call.1} parent=1 // pred_check_branch
      %44 = sbr.rel (0) target = $region17
    $region16: #{tpu_custom_call.1} parent=1 // pred_region
      %45 = dma.done [#allocation3], 32768
    $region17: #{tpu_custom_call.1} parent=1 // pred_fallthru
      _
    // Predicated region
    $region18: #{tpu_custom_call.1} parent=1 // pred_check
      _
    $region19: #{tpu_custom_call.1} parent=1 // pred_check_branch
      %47 = sbr.rel (0) target = $region21
    $region20: #{tpu_custom_call.1} parent=1 // pred_region
      %48 = dma.done [#allocation6], 1024
    $region21: #{tpu_custom_call.1} parent=1 // pred_fallthru
      _
    // Predicated region
    $region22: #{tpu_custom_call.1} parent=1 // pred_check
      _
    $region23: #{tpu_custom_call.1} parent=1 // pred_check_branch
      %50 = sbr.rel (0) target = $region25
    $region24: #{tpu_custom_call.1} parent=1 // pred_region
      %51 = dma.done [#allocation6], 1024
    $region25: #{tpu_custom_call.1} parent=1 // pred_fallthru
      _
    %v52 = vld [vmem:[#allocation2] sm:$0xff]
    %v53 = vld [vmem:[#allocation2 + $0x8] sm:$0xff]
    %v54 = vld [vmem:[#allocation2 + $0x10] sm:$0xff]
    %v55 = vld [vmem:[#allocation2 + $0x18] sm:$0xff]
    %v56 = vld [vmem:[#allocation2 + $0x20] sm:$0xff]
    %v57 = vld [vmem:[#allocation2 + $0x28] sm:$0xff]
    %v58 = vld [vmem:[#allocation2 + $0x30] sm:$0xff]
    %v59 = vld [vmem:[#allocation2 + $0x38] sm:$0xff]
    %v60 = vld [vmem:[#allocation2 + $0x40] sm:$0xff]
    %v61 = vld [vmem:[#allocation2 + $0x48] sm:$0xff]
    %v62 = vld [vmem:[#allocation2 + $0x50] sm:$0xff]
    %v63 = vld [vmem:[#allocation2 + $0x58] sm:$0xff]
    %v64 = vld [vmem:[#allocation2 + $0x60] sm:$0xff]
    %v65 = vld [vmem:[#allocation2 + $0x68] sm:$0xff]
    %v66 = vld [vmem:[#allocation2 + $0x70] sm:$0xff]
    %v67 = vld [vmem:[#allocation2 + $0x78] sm:$0xff]
    %v68 = vld [vmem:[#allocation2 + $0x80] sm:$0xff]
    %v69 = vld [vmem:[#allocation2 + $0x88] sm:$0xff]
    %v70 = vld [vmem:[#allocation2 + $0x90] sm:$0xff]
    %v71 = vld [vmem:[#allocation2 + $0x98] sm:$0xff]
    %v72 = vld [vmem:[#allocation2 + $0xa0] sm:$0xff]
    %v73 = vld [vmem:[#allocation2 + $0xa8] sm:$0xff]
    %v74 = vld [vmem:[#allocation2 + $0xb0] sm:$0xff]
    %v75 = vld [vmem:[#allocation2 + $0xb8] sm:$0xff]
    %v76 = vld [vmem:[#allocation2 + $0xc0] sm:$0xff]
    %v77 = vld [vmem:[#allocation2 + $0xc8] sm:$0xff]
    %v78 = vld [vmem:[#allocation2 + $0xd0] sm:$0xff]
    %v79 = vld [vmem:[#allocation2 + $0xd8] sm:$0xff]
    %v80 = vld [vmem:[#allocation2 + $0xe0] sm:$0xff]
    %v81 = vld [vmem:[#allocation2 + $0xe8] sm:$0xff]
    %v82 = vld [vmem:[#allocation2 + $0xf0] sm:$0xff]
    %v83 = vld [vmem:[#allocation2 + $0xf8] sm:$0xff]
    %v84 = vld [vmem:[#allocation2 + $0x100] sm:$0xff]
    %v85 = vld [vmem:[#allocation2 + $0x108] sm:$0xff]
    %v86 = vld [vmem:[#allocation2 + $0x110] sm:$0xff]
    %v87 = vld [vmem:[#allocation2 + $0x118] sm:$0xff]
    %v88 = vld [vmem:[#allocation2 + $0x120] sm:$0xff]
    %v89 = vld [vmem:[#allocation2 + $0x128] sm:$0xff]
    %v90 = vld [vmem:[#allocation2 + $0x130] sm:$0xff]
    %v91 = vld [vmem:[#allocation2 + $0x138] sm:$0xff]
    %v92 = vld [vmem:[#allocation2 + $0x140] sm:$0xff]
    %v93 = vld [vmem:[#allocation2 + $0x148] sm:$0xff]
    %v94 = vld [vmem:[#allocation2 + $0x150] sm:$0xff]
    %v95 = vld [vmem:[#allocation2 + $0x158] sm:$0xff]
    %v96 = vld [vmem:[#allocation2 + $0x160] sm:$0xff]
    %v97 = vld [vmem:[#allocation2 + $0x168] sm:$0xff]
    %v98 = vld [vmem:[#allocation2 + $0x170] sm:$0xff]
    %v99 = vld [vmem:[#allocation2 + $0x178] sm:$0xff]
    %v100 = vld [vmem:[#allocation2 + $0x180] sm:$0xff]
    %v101 = vld [vmem:[#allocation2 + $0x188] sm:$0xff]
    %v102 = vld [vmem:[#allocation2 + $0x190] sm:$0xff]
    %v103 = vld [vmem:[#allocation2 + $0x198] sm:$0xff]
    %v104 = vld [vmem:[#allocation2 + $0x1a0] sm:$0xff]
    %v105 = vld [vmem:[#allocation2 + $0x1a8] sm:$0xff]
    %v106 = vld [vmem:[#allocation2 + $0x1b0] sm:$0xff]
    %v107 = vld [vmem:[#allocation2 + $0x1b8] sm:$0xff]
    %v108 = vld [vmem:[#allocation2 + $0x1c0] sm:$0xff]
    %v109 = vld [vmem:[#allocation2 + $0x1c8] sm:$0xff]
    %v110 = vld [vmem:[#allocation2 + $0x1d0] sm:$0xff]
    %v111 = vld [vmem:[#allocation2 + $0x1d8] sm:$0xff]
    %v112 = vld [vmem:[#allocation2 + $0x1e0] sm:$0xff]
    %v113 = vld [vmem:[#allocation2 + $0x1e8] sm:$0xff]
    %v114 = vld [vmem:[#allocation2 + $0x1f0] sm:$0xff]
    %v115 = vld [vmem:[#allocation2 + $0x1f8] sm:$0xff]
    %v116 = vld [vmem:[#allocation2 + $0x200] sm:$0xff]
    %v117 = vld [vmem:[#allocation2 + $0x208] sm:$0xff]
    %v118 = vld [vmem:[#allocation2 + $0x210] sm:$0xff]
    %v119 = vld [vmem:[#allocation2 + $0x218] sm:$0xff]
    %v120 = vld [vmem:[#allocation2 + $0x220] sm:$0xff]
    %v121 = vld [vmem:[#allocation2 + $0x228] sm:$0xff]
    %v122 = vld [vmem:[#allocation2 + $0x230] sm:$0xff]
    %v123 = vld [vmem:[#allocation2 + $0x238] sm:$0xff]
    %v124 = vld [vmem:[#allocation2 + $0x240] sm:$0xff]
    %v125 = vld [vmem:[#allocation2 + $0x248] sm:$0xff]
    %v126 = vld [vmem:[#allocation2 + $0x250] sm:$0xff]
    %v127 = vld [vmem:[#allocation2 + $0x258] sm:$0xff]
    %v128 = vld [vmem:[#allocation2 + $0x260] sm:$0xff]
    %v129 = vld [vmem:[#allocation2 + $0x268] sm:$0xff]
    %v130 = vld [vmem:[#allocation2 + $0x270] sm:$0xff]
    %v131 = vld [vmem:[#allocation2 + $0x278] sm:$0xff]
    %v132 = vld [vmem:[#allocation2 + $0x280] sm:$0xff]
    %v133 = vld [vmem:[#allocation2 + $0x288] sm:$0xff]
    %v134 = vld [vmem:[#allocation2 + $0x290] sm:$0xff]
    %v135 = vld [vmem:[#allocation2 + $0x298] sm:$0xff]
    %v136 = vld [vmem:[#allocation2 + $0x2a0] sm:$0xff]
    %v137 = vld [vmem:[#allocation2 + $0x2a8] sm:$0xff]
    %v138 = vld [vmem:[#allocation2 + $0x2b0] sm:$0xff]
    %v139 = vld [vmem:[#allocation2 + $0x2b8] sm:$0xff]
    %v140 = vld [vmem:[#allocation2 + $0x2c0] sm:$0xff]
    %v141 = vld [vmem:[#allocation2 + $0x2c8] sm:$0xff]
    %v142 = vld [vmem:[#allocation2 + $0x2d0] sm:$0xff]
    %v143 = vld [vmem:[#allocation2 + $0x2d8] sm:$0xff]
    %v144 = vld [vmem:[#allocation2 + $0x2e0] sm:$0xff]
    %v145 = vld [vmem:[#allocation2 + $0x2e8] sm:$0xff]
    %v146 = vld [vmem:[#allocation2 + $0x2f0] sm:$0xff]
    %v147 = vld [vmem:[#allocation2 + $0x2f8] sm:$0xff]
    %v148 = vld [vmem:[#allocation2 + $0x300] sm:$0xff]
    %v149 = vld [vmem:[#allocation2 + $0x308] sm:$0xff]
    %v150 = vld [vmem:[#allocation2 + $0x310] sm:$0xff]
    %v151 = vld [vmem:[#allocation2 + $0x318] sm:$0xff]
    %v152 = vld [vmem:[#allocation2 + $0x320] sm:$0xff]
    %v153 = vld [vmem:[#allocation2 + $0x328] sm:$0xff]
    %v154 = vld [vmem:[#allocation2 + $0x330] sm:$0xff]
    %v155 = vld [vmem:[#allocation2 + $0x338] sm:$0xff]
    %v156 = vld [vmem:[#allocation2 + $0x340] sm:$0xff]
    %v157 = vld [vmem:[#allocation2 + $0x348] sm:$0xff]
    %v158 = vld [vmem:[#allocation2 + $0x350] sm:$0xff]
    %v159 = vld [vmem:[#allocation2 + $0x358] sm:$0xff]
    %v160 = vld [vmem:[#allocation2 + $0x360] sm:$0xff]
    %v161 = vld [vmem:[#allocation2 + $0x368] sm:$0xff]
    %v162 = vld [vmem:[#allocation2 + $0x370] sm:$0xff]
    %v163 = vld [vmem:[#allocation2 + $0x378] sm:$0xff]
    %v164 = vld [vmem:[#allocation2 + $0x380] sm:$0xff]
    %v165 = vld [vmem:[#allocation2 + $0x388] sm:$0xff]
    %v166 = vld [vmem:[#allocation2 + $0x390] sm:$0xff]
    %v167 = vld [vmem:[#allocation2 + $0x398] sm:$0xff]
    %v168 = vld [vmem:[#allocation2 + $0x3a0] sm:$0xff]
    %v169 = vld [vmem:[#allocation2 + $0x3a8] sm:$0xff]
    %v170 = vld [vmem:[#allocation2 + $0x3b0] sm:$0xff]
    %v171 = vld [vmem:[#allocation2 + $0x3b8] sm:$0xff]
    %v172 = vld [vmem:[#allocation2 + $0x3c0] sm:$0xff]
    %v173 = vld [vmem:[#allocation2 + $0x3c8] sm:$0xff]
    %v174 = vld [vmem:[#allocation2 + $0x3d0] sm:$0xff]
    %v175 = vld [vmem:[#allocation2 + $0x3d8] sm:$0xff]
    %v176 = vld [vmem:[#allocation2 + $0x3e0] sm:$0xff]
    %v177 = vld [vmem:[#allocation2 + $0x3e8] sm:$0xff]
    %v178 = vld [vmem:[#allocation2 + $0x3f0] sm:$0xff]
    %v179 = vld [vmem:[#allocation2 + $0x3f8] sm:$0xff]
    %v180 = vld [vmem:[#allocation2 + $0x400] sm:$0xff]
    %v181 = vld [vmem:[#allocation2 + $0x408] sm:$0xff]
    %v182 = vld [vmem:[#allocation2 + $0x410] sm:$0xff]
    %v183 = vld [vmem:[#allocation2 + $0x418] sm:$0xff]
    %v184 = vld [vmem:[#allocation2 + $0x420] sm:$0xff]
    %v185 = vld [vmem:[#allocation2 + $0x428] sm:$0xff]
    %v186 = vld [vmem:[#allocation2 + $0x430] sm:$0xff]
    %v187 = vld [vmem:[#allocation2 + $0x438] sm:$0xff]
    %v188 = vld [vmem:[#allocation2 + $0x440] sm:$0xff]
    %v189 = vld [vmem:[#allocation2 + $0x448] sm:$0xff]
    %v190 = vld [vmem:[#allocation2 + $0x450] sm:$0xff]
    %v191 = vld [vmem:[#allocation2 + $0x458] sm:$0xff]
    %v192 = vld [vmem:[#allocation2 + $0x460] sm:$0xff]
    %v193 = vld [vmem:[#allocation2 + $0x468] sm:$0xff]
    %v194 = vld [vmem:[#allocation2 + $0x470] sm:$0xff]
    %v195 = vld [vmem:[#allocation2 + $0x478] sm:$0xff]
    %v196 = vld [vmem:[#allocation2 + $0x480] sm:$0xff]
    %v197 = vld [vmem:[#allocation2 + $0x488] sm:$0xff]
    %v198 = vld [vmem:[#allocation2 + $0x490] sm:$0xff]
    %v199 = vld [vmem:[#allocation2 + $0x498] sm:$0xff]
    %v200 = vld [vmem:[#allocation2 + $0x4a0] sm:$0xff]
    %v201 = vld [vmem:[#allocation2 + $0x4a8] sm:$0xff]
    %v202 = vld [vmem:[#allocation2 + $0x4b0] sm:$0xff]
    %v203 = vld [vmem:[#allocation2 + $0x4b8] sm:$0xff]
    %v204 = vld [vmem:[#allocation2 + $0x4c0] sm:$0xff]
    %v205 = vld [vmem:[#allocation2 + $0x4c8] sm:$0xff]
    %v206 = vld [vmem:[#allocation2 + $0x4d0] sm:$0xff]
    %v207 = vld [vmem:[#allocation2 + $0x4d8] sm:$0xff]
    %v208 = vld [vmem:[#allocation2 + $0x4e0] sm:$0xff]
    %v209 = vld [vmem:[#allocation2 + $0x4e8] sm:$0xff]
    %v210 = vld [vmem:[#allocation2 + $0x4f0] sm:$0xff]
    %v211 = vld [vmem:[#allocation2 + $0x4f8] sm:$0xff]
    %v212 = vld [vmem:[#allocation2 + $0x500] sm:$0xff]
    %v213 = vld [vmem:[#allocation2 + $0x508] sm:$0xff]
    %v214 = vld [vmem:[#allocation2 + $0x510] sm:$0xff]
    %v215 = vld [vmem:[#allocation2 + $0x518] sm:$0xff]
    %v216 = vld [vmem:[#allocation2 + $0x520] sm:$0xff]
    %v217 = vld [vmem:[#allocation2 + $0x528] sm:$0xff]
    %v218 = vld [vmem:[#allocation2 + $0x530] sm:$0xff]
    %v219 = vld [vmem:[#allocation2 + $0x538] sm:$0xff]
    %v220 = vld [vmem:[#allocation2 + $0x540] sm:$0xff]
    %v221 = vld [vmem:[#allocation2 + $0x548] sm:$0xff]
    %v222 = vld [vmem:[#allocation2 + $0x550] sm:$0xff]
    %v223 = vld [vmem:[#allocation2 + $0x558] sm:$0xff]
    %v224 = vld [vmem:[#allocation2 + $0x560] sm:$0xff]
    %v225 = vld [vmem:[#allocation2 + $0x568] sm:$0xff]
    %v226 = vld [vmem:[#allocation2 + $0x570] sm:$0xff]
    %v227 = vld [vmem:[#allocation2 + $0x578] sm:$0xff]
    %v228 = vld [vmem:[#allocation2 + $0x580] sm:$0xff]
    %v229 = vld [vmem:[#allocation2 + $0x588] sm:$0xff]
    %v230 = vld [vmem:[#allocation2 + $0x590] sm:$0xff]
    %v231 = vld [vmem:[#allocation2 + $0x598] sm:$0xff]
    %v232 = vld [vmem:[#allocation2 + $0x5a0] sm:$0xff]
    %v233 = vld [vmem:[#allocation2 + $0x5a8] sm:$0xff]
    %v234 = vld [vmem:[#allocation2 + $0x5b0] sm:$0xff]
    %v235 = vld [vmem:[#allocation2 + $0x5b8] sm:$0xff]
    %v236 = vld [vmem:[#allocation2 + $0x5c0] sm:$0xff]
    %v237 = vld [vmem:[#allocation2 + $0x5c8] sm:$0xff]
    %v238 = vld [vmem:[#allocation2 + $0x5d0] sm:$0xff]
    %v239 = vld [vmem:[#allocation2 + $0x5d8] sm:$0xff]
    %v240 = vld [vmem:[#allocation2 + $0x5e0] sm:$0xff]
    %v241 = vld [vmem:[#allocation2 + $0x5e8] sm:$0xff]
    %v242 = vld [vmem:[#allocation2 + $0x5f0] sm:$0xff]
    %v243 = vld [vmem:[#allocation2 + $0x5f8] sm:$0xff]
    %v244 = vld [vmem:[#allocation2 + $0x600] sm:$0xff]
    %v245 = vld [vmem:[#allocation2 + $0x608] sm:$0xff]
    %v246 = vld [vmem:[#allocation2 + $0x610] sm:$0xff]
    %v247 = vld [vmem:[#allocation2 + $0x618] sm:$0xff]
    %v248 = vld [vmem:[#allocation2 + $0x620] sm:$0xff]
    %v249 = vld [vmem:[#allocation2 + $0x628] sm:$0xff]
    %v250 = vld [vmem:[#allocation2 + $0x630] sm:$0xff]
    %v251 = vld [vmem:[#allocation2 + $0x638] sm:$0xff]
    %v252 = vld [vmem:[#allocation2 + $0x640] sm:$0xff]
    %v253 = vld [vmem:[#allocation2 + $0x648] sm:$0xff]
    %v254 = vld [vmem:[#allocation2 + $0x650] sm:$0xff]
    %v255 = vld [vmem:[#allocation2 + $0x658] sm:$0xff]
    %v256 = vld [vmem:[#allocation2 + $0x660] sm:$0xff]
    %v257 = vld [vmem:[#allocation2 + $0x668] sm:$0xff]
    %v258 = vld [vmem:[#allocation2 + $0x670] sm:$0xff]
    %v259 = vld [vmem:[#allocation2 + $0x678] sm:$0xff]
    %v260 = vld [vmem:[#allocation2 + $0x680] sm:$0xff]
    %v261 = vld [vmem:[#allocation2 + $0x688] sm:$0xff]
    %v262 = vld [vmem:[#allocation2 + $0x690] sm:$0xff]
    %v263 = vld [vmem:[#allocation2 + $0x698] sm:$0xff]
    %v264 = vld [vmem:[#allocation2 + $0x6a0] sm:$0xff]
    %v265 = vld [vmem:[#allocation2 + $0x6a8] sm:$0xff]
    %v266 = vld [vmem:[#allocation2 + $0x6b0] sm:$0xff]
    %v267 = vld [vmem:[#allocation2 + $0x6b8] sm:$0xff]
    %v268 = vld [vmem:[#allocation2 + $0x6c0] sm:$0xff]
    %v269 = vld [vmem:[#allocation2 + $0x6c8] sm:$0xff]
    %v270 = vld [vmem:[#allocation2 + $0x6d0] sm:$0xff]
    %v271 = vld [vmem:[#allocation2 + $0x6d8] sm:$0xff]
    %v272 = vld [vmem:[#allocation2 + $0x6e0] sm:$0xff]
    %v273 = vld [vmem:[#allocation2 + $0x6e8] sm:$0xff]
    %v274 = vld [vmem:[#allocation2 + $0x6f0] sm:$0xff]
    %v275 = vld [vmem:[#allocation2 + $0x6f8] sm:$0xff]
    %v276 = vld [vmem:[#allocation2 + $0x700] sm:$0xff]
    %v277 = vld [vmem:[#allocation2 + $0x708] sm:$0xff]
    %v278 = vld [vmem:[#allocation2 + $0x710] sm:$0xff]
    %v279 = vld [vmem:[#allocation2 + $0x718] sm:$0xff]
    %v280 = vld [vmem:[#allocation2 + $0x720] sm:$0xff]
    %v281 = vld [vmem:[#allocation2 + $0x728] sm:$0xff]
    %v282 = vld [vmem:[#allocation2 + $0x730] sm:$0xff]
    %v283 = vld [vmem:[#allocation2 + $0x738] sm:$0xff]
    %v284 = vld [vmem:[#allocation2 + $0x740] sm:$0xff]
    %v285 = vld [vmem:[#allocation2 + $0x748] sm:$0xff]
    %v286 = vld [vmem:[#allocation2 + $0x750] sm:$0xff]
    %v287 = vld [vmem:[#allocation2 + $0x758] sm:$0xff]
    %v288 = vld [vmem:[#allocation2 + $0x760] sm:$0xff]
    %v289 = vld [vmem:[#allocation2 + $0x768] sm:$0xff]
    %v290 = vld [vmem:[#allocation2 + $0x770] sm:$0xff]
    %v291 = vld [vmem:[#allocation2 + $0x778] sm:$0xff]
    %v292 = vld [vmem:[#allocation2 + $0x780] sm:$0xff]
    %v293 = vld [vmem:[#allocation2 + $0x788] sm:$0xff]
    %v294 = vld [vmem:[#allocation2 + $0x790] sm:$0xff]
    %v295 = vld [vmem:[#allocation2 + $0x798] sm:$0xff]
    %v296 = vld [vmem:[#allocation2 + $0x7a0] sm:$0xff]
    %v297 = vld [vmem:[#allocation2 + $0x7a8] sm:$0xff]
    %v298 = vld [vmem:[#allocation2 + $0x7b0] sm:$0xff]
    %v299 = vld [vmem:[#allocation2 + $0x7b8] sm:$0xff]
    %v300 = vld [vmem:[#allocation2 + $0x7c0] sm:$0xff]
    %v301 = vld [vmem:[#allocation2 + $0x7c8] sm:$0xff]
    %v302 = vld [vmem:[#allocation2 + $0x7d0] sm:$0xff]
    %v303 = vld [vmem:[#allocation2 + $0x7d8] sm:$0xff]
    %v304 = vld [vmem:[#allocation2 + $0x7e0] sm:$0xff]
    %v305 = vld [vmem:[#allocation2 + $0x7e8] sm:$0xff]
    %v306 = vld [vmem:[#allocation2 + $0x7f0] sm:$0xff]
    %v307 = vld [vmem:[#allocation2 + $0x7f8] sm:$0xff]
    %v308 = vld [vmem:[#allocation5] sm:$0xff]
    %v309 = vld [vmem:[#allocation5 + $0x8] sm:$0xff]
    %v310 = vld [vmem:[#allocation5 + $0x10] sm:$0xff]
    %v311 = vld [vmem:[#allocation5 + $0x18] sm:$0xff]
    %v312 = vld [vmem:[#allocation5 + $0x20] sm:$0xff]
    %v313 = vld [vmem:[#allocation5 + $0x28] sm:$0xff]
    %v314 = vld [vmem:[#allocation5 + $0x30] sm:$0xff]
    %v315 = vld [vmem:[#allocation5 + $0x38] sm:$0xff]
    %v324 = vlaneseq
    %v325 = vshrl.u32 %v324, 7
    %v326 = vsub.s32 0, %v325
    %v327 = vrot.slane %v308, %v326
    %v328 = vlaneseq
    %v329 = vshrl.u32 %v328, 7
    %v330 = vsub.s32 1, %v329
    %v331 = vrot.slane %v308, %v330
    %v332 = vlaneseq
    %v333 = vshrl.u32 %v332, 7
    %v334 = vsub.s32 2, %v333
    %v335 = vrot.slane %v308, %v334
    %v336 = vlaneseq
    %v337 = vshrl.u32 %v336, 7
    %v338 = vsub.s32 3, %v337
    %v339 = vrot.slane %v308, %v338
    %v340 = vlaneseq
    %v341 = vshrl.u32 %v340, 7
    %v342 = vsub.s32 4, %v341
    %v343 = vrot.slane %v308, %v342
    %v344 = vlaneseq
    %v345 = vshrl.u32 %v344, 7
    %v346 = vsub.s32 5, %v345
    %v347 = vrot.slane %v308, %v346
    %v348 = vlaneseq
    %v349 = vshrl.u32 %v348, 7
    %v350 = vsub.s32 6, %v349
    %v351 = vrot.slane %v308, %v350
    %v352 = vlaneseq
    %v353 = vshrl.u32 %v352, 7
    %v354 = vsub.s32 7, %v353
    %v355 = vrot.slane %v308, %v354
    %v356 = vlaneseq
    %v357 = vshrl.u32 %v356, 7
    %v358 = vsub.s32 0, %v357
    %v359 = vrot.slane %v309, %v358
    %v360 = vlaneseq
    %v361 = vshrl.u32 %v360, 7
    %v362 = vsub.s32 1, %v361
    %v363 = vrot.slane %v309, %v362
    %v364 = vlaneseq
    %v365 = vshrl.u32 %v364, 7
    %v366 = vsub.s32 2, %v365
    %v367 = vrot.slane %v309, %v366
    %v368 = vlaneseq
    %v369 = vshrl.u32 %v368, 7
    %v370 = vsub.s32 3, %v369
    %v371 = vrot.slane %v309, %v370
    %v372 = vlaneseq
    %v373 = vshrl.u32 %v372, 7
    %v374 = vsub.s32 4, %v373
    %v375 = vrot.slane %v309, %v374
    %v376 = vlaneseq
    %v377 = vshrl.u32 %v376, 7
    %v378 = vsub.s32 5, %v377
    %v379 = vrot.slane %v309, %v378
    %v380 = vlaneseq
    %v381 = vshrl.u32 %v380, 7
    %v382 = vsub.s32 6, %v381
    %v383 = vrot.slane %v309, %v382
    %v384 = vlaneseq
    %v385 = vshrl.u32 %v384, 7
    %v386 = vsub.s32 7, %v385
    %v387 = vrot.slane %v309, %v386
    %v388 = vlaneseq
    %v389 = vshrl.u32 %v388, 7
    %v390 = vsub.s32 0, %v389
    %v391 = vrot.slane %v310, %v390
    %v392 = vlaneseq
    %v393 = vshrl.u32 %v392, 7
    %v394 = vsub.s32 1, %v393
    %v395 = vrot.slane %v310, %v394
    %v396 = vlaneseq
    %v397 = vshrl.u32 %v396, 7
    %v398 = vsub.s32 2, %v397
    %v399 = vrot.slane %v310, %v398
    %v400 = vlaneseq
    %v401 = vshrl.u32 %v400, 7
    %v402 = vsub.s32 3, %v401
    %v403 = vrot.slane %v310, %v402
    %v404 = vlaneseq
    %v405 = vshrl.u32 %v404, 7
    %v406 = vsub.s32 4, %v405
    %v407 = vrot.slane %v310, %v406
    %v408 = vlaneseq
    %v409 = vshrl.u32 %v408, 7
    %v410 = vsub.s32 5, %v409
    %v411 = vrot.slane %v310, %v410
    %v412 = vlaneseq
    %v413 = vshrl.u32 %v412, 7
    %v414 = vsub.s32 6, %v413
    %v415 = vrot.slane %v310, %v414
    %v416 = vlaneseq
    %v417 = vshrl.u32 %v416, 7
    %v418 = vsub.s32 7, %v417
    %v419 = vrot.slane %v310, %v418
    %v420 = vlaneseq
    %v421 = vshrl.u32 %v420, 7
    %v422 = vsub.s32 0, %v421
    %v423 = vrot.slane %v311, %v422
    %v424 = vlaneseq
    %v425 = vshrl.u32 %v424, 7
    %v426 = vsub.s32 1, %v425
    %v427 = vrot.slane %v311, %v426
    %v428 = vlaneseq
    %v429 = vshrl.u32 %v428, 7
    %v430 = vsub.s32 2, %v429
    %v431 = vrot.slane %v311, %v430
    %v432 = vlaneseq
    %v433 = vshrl.u32 %v432, 7
    %v434 = vsub.s32 3, %v433
    %v435 = vrot.slane %v311, %v434
    %v436 = vlaneseq
    %v437 = vshrl.u32 %v436, 7
    %v438 = vsub.s32 4, %v437
    %v439 = vrot.slane %v311, %v438
    %v440 = vlaneseq
    %v441 = vshrl.u32 %v440, 7
    %v442 = vsub.s32 5, %v441
    %v443 = vrot.slane %v311, %v442
    %v444 = vlaneseq
    %v445 = vshrl.u32 %v444, 7
    %v446 = vsub.s32 6, %v445
    %v447 = vrot.slane %v311, %v446
    %v448 = vlaneseq
    %v449 = vshrl.u32 %v448, 7
    %v450 = vsub.s32 7, %v449
    %v451 = vrot.slane %v311, %v450
    %v452 = vlaneseq
    %v453 = vshrl.u32 %v452, 7
    %v454 = vsub.s32 0, %v453
    %v455 = vrot.slane %v312, %v454
    %v456 = vlaneseq
    %v457 = vshrl.u32 %v456, 7
    %v458 = vsub.s32 1, %v457
    %v459 = vrot.slane %v312, %v458
    %v460 = vlaneseq
    %v461 = vshrl.u32 %v460, 7
    %v462 = vsub.s32 2, %v461
    %v463 = vrot.slane %v312, %v462
    %v464 = vlaneseq
    %v465 = vshrl.u32 %v464, 7
    %v466 = vsub.s32 3, %v465
    %v467 = vrot.slane %v312, %v466
    %v468 = vlaneseq
    %v469 = vshrl.u32 %v468, 7
    %v470 = vsub.s32 4, %v469
    %v471 = vrot.slane %v312, %v470
    %v472 = vlaneseq
    %v473 = vshrl.u32 %v472, 7
    %v474 = vsub.s32 5, %v473
    %v475 = vrot.slane %v312, %v474
    %v476 = vlaneseq
    %v477 = vshrl.u32 %v476, 7
    %v478 = vsub.s32 6, %v477
    %v479 = vrot.slane %v312, %v478
    %v480 = vlaneseq
    %v481 = vshrl.u32 %v480, 7
    %v482 = vsub.s32 7, %v481
    %v483 = vrot.slane %v312, %v482
    %v484 = vlaneseq
    %v485 = vshrl.u32 %v484, 7
    %v486 = vsub.s32 0, %v485
    %v487 = vrot.slane %v313, %v486
    %v488 = vlaneseq
    %v489 = vshrl.u32 %v488, 7
    %v490 = vsub.s32 1, %v489
    %v491 = vrot.slane %v313, %v490
    %v492 = vlaneseq
    %v493 = vshrl.u32 %v492, 7
    %v494 = vsub.s32 2, %v493
    %v495 = vrot.slane %v313, %v494
    %v496 = vlaneseq
    %v497 = vshrl.u32 %v496, 7
    %v498 = vsub.s32 3, %v497
    %v499 = vrot.slane %v313, %v498
    %v500 = vlaneseq
    %v501 = vshrl.u32 %v500, 7
    %v502 = vsub.s32 4, %v501
    %v503 = vrot.slane %v313, %v502
    %v504 = vlaneseq
    %v505 = vshrl.u32 %v504, 7
    %v506 = vsub.s32 5, %v505
    %v507 = vrot.slane %v313, %v506
    %v508 = vlaneseq
    %v509 = vshrl.u32 %v508, 7
    %v510 = vsub.s32 6, %v509
    %v511 = vrot.slane %v313, %v510
    %v512 = vlaneseq
    %v513 = vshrl.u32 %v512, 7
    %v514 = vsub.s32 7, %v513
    %v515 = vrot.slane %v313, %v514
    %v516 = vlaneseq
    %v517 = vshrl.u32 %v516, 7
    %v518 = vsub.s32 0, %v517
    %v519 = vrot.slane %v314, %v518
    %v520 = vlaneseq
    %v521 = vshrl.u32 %v520, 7
    %v522 = vsub.s32 1, %v521
    %v523 = vrot.slane %v314, %v522
    %v524 = vlaneseq
    %v525 = vshrl.u32 %v524, 7
    %v526 = vsub.s32 2, %v525
    %v527 = vrot.slane %v314, %v526
    %v528 = vlaneseq
    %v529 = vshrl.u32 %v528, 7
    %v530 = vsub.s32 3, %v529
    %v531 = vrot.slane %v314, %v530
    %v532 = vlaneseq
    %v533 = vshrl.u32 %v532, 7
    %v534 = vsub.s32 4, %v533
    %v535 = vrot.slane %v314, %v534
    %v536 = vlaneseq
    %v537 = vshrl.u32 %v536, 7
    %v538 = vsub.s32 5, %v537
    %v539 = vrot.slane %v314, %v538
    %v540 = vlaneseq
    %v541 = vshrl.u32 %v540, 7
    %v542 = vsub.s32 6, %v541
    %v543 = vrot.slane %v314, %v542
    %v544 = vlaneseq
    %v545 = vshrl.u32 %v544, 7
    %v546 = vsub.s32 7, %v545
    %v547 = vrot.slane %v314, %v546
    %v548 = vlaneseq
    %v549 = vshrl.u32 %v548, 7
    %v550 = vsub.s32 0, %v549
    %v551 = vrot.slane %v315, %v550
    %v552 = vlaneseq
    %v553 = vshrl.u32 %v552, 7
    %v554 = vsub.s32 1, %v553
    %v555 = vrot.slane %v315, %v554
    %v556 = vlaneseq
    %v557 = vshrl.u32 %v556, 7
    %v558 = vsub.s32 2, %v557
    %v559 = vrot.slane %v315, %v558
    %v560 = vlaneseq
    %v561 = vshrl.u32 %v560, 7
    %v562 = vsub.s32 3, %v561
    %v563 = vrot.slane %v315, %v562
    %v564 = vlaneseq
    %v565 = vshrl.u32 %v564, 7
    %v566 = vsub.s32 4, %v565
    %v567 = vrot.slane %v315, %v566
    %v568 = vlaneseq
    %v569 = vshrl.u32 %v568, 7
    %v570 = vsub.s32 5, %v569
    %v571 = vrot.slane %v315, %v570
    %v572 = vlaneseq
    %v573 = vshrl.u32 %v572, 7
    %v574 = vsub.s32 6, %v573
    %v575 = vrot.slane %v315, %v574
    %v576 = vlaneseq
    %v577 = vshrl.u32 %v576, 7
    %v578 = vsub.s32 7, %v577
    %v579 = vrot.slane %v315, %v578
    %v644 = vmul.f32 %v52, %v327
    %v645 = vmul.f32 %v53, %v331
    %v646 = vmul.f32 %v54, %v335
    %v647 = vmul.f32 %v55, %v339
    %v648 = vmul.f32 %v56, %v343
    %v649 = vmul.f32 %v57, %v347
    %v650 = vmul.f32 %v58, %v351
    %v651 = vmul.f32 %v59, %v355
    %v652 = vmul.f32 %v60, %v359
    %v653 = vmul.f32 %v61, %v363
    %v654 = vmul.f32 %v62, %v367
    %v655 = vmul.f32 %v63, %v371
    %v656 = vmul.f32 %v64, %v375
    %v657 = vmul.f32 %v65, %v379
    %v658 = vmul.f32 %v66, %v383
    %v659 = vmul.f32 %v67, %v387
    %v660 = vmul.f32 %v68, %v391
    %v661 = vmul.f32 %v69, %v395
    %v662 = vmul.f32 %v70, %v399
    %v663 = vmul.f32 %v71, %v403
    %v664 = vmul.f32 %v72, %v407
    %v665 = vmul.f32 %v73, %v411
    %v666 = vmul.f32 %v74, %v415
    %v667 = vmul.f32 %v75, %v419
    %v668 = vmul.f32 %v76, %v423
    %v669 = vmul.f32 %v77, %v427
    %v670 = vmul.f32 %v78, %v431
    %v671 = vmul.f32 %v79, %v435
    %v672 = vmul.f32 %v80, %v439
    %v673 = vmul.f32 %v81, %v443
    %v674 = vmul.f32 %v82, %v447
    %v675 = vmul.f32 %v83, %v451
    %v676 = vmul.f32 %v84, %v455
    %v677 = vmul.f32 %v85, %v459
    %v678 = vmul.f32 %v86, %v463
    %v679 = vmul.f32 %v87, %v467
    %v680 = vmul.f32 %v88, %v471
    %v681 = vmul.f32 %v89, %v475
    %v682 = vmul.f32 %v90, %v479
    %v683 = vmul.f32 %v91, %v483
    %v684 = vmul.f32 %v92, %v487
    %v685 = vmul.f32 %v93, %v491
    %v686 = vmul.f32 %v94, %v495
    %v687 = vmul.f32 %v95, %v499
    %v688 = vmul.f32 %v96, %v503
    %v689 = vmul.f32 %v97, %v507
    %v690 = vmul.f32 %v98, %v511
    %v691 = vmul.f32 %v99, %v515
    %v692 = vmul.f32 %v100, %v519
    %v693 = vmul.f32 %v101, %v523
    %v694 = vmul.f32 %v102, %v527
    %v695 = vmul.f32 %v103, %v531
    %v696 = vmul.f32 %v104, %v535
    %v697 = vmul.f32 %v105, %v539
    %v698 = vmul.f32 %v106, %v543
    %v699 = vmul.f32 %v107, %v547
    %v700 = vmul.f32 %v108, %v551
    %v701 = vmul.f32 %v109, %v555
    %v702 = vmul.f32 %v110, %v559
    %v703 = vmul.f32 %v111, %v563
    %v704 = vmul.f32 %v112, %v567
    %v705 = vmul.f32 %v113, %v571
    %v706 = vmul.f32 %v114, %v575
    %v707 = vmul.f32 %v115, %v579
    %v708 = vmul.f32 %v116, %v327
    %v709 = vmul.f32 %v117, %v331
    %v710 = vmul.f32 %v118, %v335
    %v711 = vmul.f32 %v119, %v339
    %v712 = vmul.f32 %v120, %v343
    %v713 = vmul.f32 %v121, %v347
    %v714 = vmul.f32 %v122, %v351
    %v715 = vmul.f32 %v123, %v355
    %v716 = vmul.f32 %v124, %v359
    %v717 = vmul.f32 %v125, %v363
    %v718 = vmul.f32 %v126, %v367
    %v719 = vmul.f32 %v127, %v371
    %v720 = vmul.f32 %v128, %v375
    %v721 = vmul.f32 %v129, %v379
    %v722 = vmul.f32 %v130, %v383
    %v723 = vmul.f32 %v131, %v387
    %v724 = vmul.f32 %v132, %v391
    %v725 = vmul.f32 %v133, %v395
    %v726 = vmul.f32 %v134, %v399
    %v727 = vmul.f32 %v135, %v403
    %v728 = vmul.f32 %v136, %v407
    %v729 = vmul.f32 %v137, %v411
    %v730 = vmul.f32 %v138, %v415
    %v731 = vmul.f32 %v139, %v419
    %v732 = vmul.f32 %v140, %v423
    %v733 = vmul.f32 %v141, %v427
    %v734 = vmul.f32 %v142, %v431
    %v735 = vmul.f32 %v143, %v435
    %v736 = vmul.f32 %v144, %v439
    %v737 = vmul.f32 %v145, %v443
    %v738 = vmul.f32 %v146, %v447
    %v739 = vmul.f32 %v147, %v451
    %v740 = vmul.f32 %v148, %v455
    %v741 = vmul.f32 %v149, %v459
    %v742 = vmul.f32 %v150, %v463
    %v743 = vmul.f32 %v151, %v467
    %v744 = vmul.f32 %v152, %v471
    %v745 = vmul.f32 %v153, %v475
    %v746 = vmul.f32 %v154, %v479
    %v747 = vmul.f32 %v155, %v483
    %v748 = vmul.f32 %v156, %v487
    %v749 = vmul.f32 %v157, %v491
    %v750 = vmul.f32 %v158, %v495
    %v751 = vmul.f32 %v159, %v499
    %v752 = vmul.f32 %v160, %v503
    %v753 = vmul.f32 %v161, %v507
    %v754 = vmul.f32 %v162, %v511
    %v755 = vmul.f32 %v163, %v515
    %v756 = vmul.f32 %v164, %v519
    %v757 = vmul.f32 %v165, %v523
    %v758 = vmul.f32 %v166, %v527
    %v759 = vmul.f32 %v167, %v531
    %v760 = vmul.f32 %v168, %v535
    %v761 = vmul.f32 %v169, %v539
    %v762 = vmul.f32 %v170, %v543
    %v763 = vmul.f32 %v171, %v547
    %v764 = vmul.f32 %v172, %v551
    %v765 = vmul.f32 %v173, %v555
    %v766 = vmul.f32 %v174, %v559
    %v767 = vmul.f32 %v175, %v563
    %v768 = vmul.f32 %v176, %v567
    %v769 = vmul.f32 %v177, %v571
    %v770 = vmul.f32 %v178, %v575
    %v771 = vmul.f32 %v179, %v579
    %v772 = vmul.f32 %v180, %v327
    %v773 = vmul.f32 %v181, %v331
    %v774 = vmul.f32 %v182, %v335
    %v775 = vmul.f32 %v183, %v339
    %v776 = vmul.f32 %v184, %v343
    %v777 = vmul.f32 %v185, %v347
    %v778 = vmul.f32 %v186, %v351
    %v779 = vmul.f32 %v187, %v355
    %v780 = vmul.f32 %v188, %v359
    %v781 = vmul.f32 %v189, %v363
    %v782 = vmul.f32 %v190, %v367
    %v783 = vmul.f32 %v191, %v371
    %v784 = vmul.f32 %v192, %v375
    %v785 = vmul.f32 %v193, %v379
    %v786 = vmul.f32 %v194, %v383
    %v787 = vmul.f32 %v195, %v387
    %v788 = vmul.f32 %v196, %v391
    %v789 = vmul.f32 %v197, %v395
    %v790 = vmul.f32 %v198, %v399
    %v791 = vmul.f32 %v199, %v403
    %v792 = vmul.f32 %v200, %v407
    %v793 = vmul.f32 %v201, %v411
    %v794 = vmul.f32 %v202, %v415
    %v795 = vmul.f32 %v203, %v419
    %v796 = vmul.f32 %v204, %v423
    %v797 = vmul.f32 %v205, %v427
    %v798 = vmul.f32 %v206, %v431
    %v799 = vmul.f32 %v207, %v435
    %v800 = vmul.f32 %v208, %v439
    %v801 = vmul.f32 %v209, %v443
    %v802 = vmul.f32 %v210, %v447
    %v803 = vmul.f32 %v211, %v451
    %v804 = vmul.f32 %v212, %v455
    %v805 = vmul.f32 %v213, %v459
    %v806 = vmul.f32 %v214, %v463
    %v807 = vmul.f32 %v215, %v467
    %v808 = vmul.f32 %v216, %v471
    %v809 = vmul.f32 %v217, %v475
    %v810 = vmul.f32 %v218, %v479
    %v811 = vmul.f32 %v219, %v483
    %v812 = vmul.f32 %v220, %v487
    %v813 = vmul.f32 %v221, %v491
    %v814 = vmul.f32 %v222, %v495
    %v815 = vmul.f32 %v223, %v499
    %v816 = vmul.f32 %v224, %v503
    %v817 = vmul.f32 %v225, %v507
    %v818 = vmul.f32 %v226, %v511
    %v819 = vmul.f32 %v227, %v515
    %v820 = vmul.f32 %v228, %v519
    %v821 = vmul.f32 %v229, %v523
    %v822 = vmul.f32 %v230, %v527
    %v823 = vmul.f32 %v231, %v531
    %v824 = vmul.f32 %v232, %v535
    %v825 = vmul.f32 %v233, %v539
    %v826 = vmul.f32 %v234, %v543
    %v827 = vmul.f32 %v235, %v547
    %v828 = vmul.f32 %v236, %v551
    %v829 = vmul.f32 %v237, %v555
    %v830 = vmul.f32 %v238, %v559
    %v831 = vmul.f32 %v239, %v563
    %v832 = vmul.f32 %v240, %v567
    %v833 = vmul.f32 %v241, %v571
    %v834 = vmul.f32 %v242, %v575
    %v835 = vmul.f32 %v243, %v579
    %v836 = vmul.f32 %v244, %v327
    %v837 = vmul.f32 %v245, %v331
    %v838 = vmul.f32 %v246, %v335
    %v839 = vmul.f32 %v247, %v339
    %v840 = vmul.f32 %v248, %v343
    %v841 = vmul.f32 %v249, %v347
    %v842 = vmul.f32 %v250, %v351
    %v843 = vmul.f32 %v251, %v355
    %v844 = vmul.f32 %v252, %v359
    %v845 = vmul.f32 %v253, %v363
    %v846 = vmul.f32 %v254, %v367
    %v847 = vmul.f32 %v255, %v371
    %v848 = vmul.f32 %v256, %v375
    %v849 = vmul.f32 %v257, %v379
    %v850 = vmul.f32 %v258, %v383
    %v851 = vmul.f32 %v259, %v387
    %v852 = vmul.f32 %v260, %v391
    %v853 = vmul.f32 %v261, %v395
    %v854 = vmul.f32 %v262, %v399
    %v855 = vmul.f32 %v263, %v403
    %v856 = vmul.f32 %v264, %v407
    %v857 = vmul.f32 %v265, %v411
    %v858 = vmul.f32 %v266, %v415
    %v859 = vmul.f32 %v267, %v419
    %v860 = vmul.f32 %v268, %v423
    %v861 = vmul.f32 %v269, %v427
    %v862 = vmul.f32 %v270, %v431
    %v863 = vmul.f32 %v271, %v435
    %v864 = vmul.f32 %v272, %v439
    %v865 = vmul.f32 %v273, %v443
    %v866 = vmul.f32 %v274, %v447
    %v867 = vmul.f32 %v275, %v451
    %v868 = vmul.f32 %v276, %v455
    %v869 = vmul.f32 %v277, %v459
    %v870 = vmul.f32 %v278, %v463
    %v871 = vmul.f32 %v279, %v467
    %v872 = vmul.f32 %v280, %v471
    %v873 = vmul.f32 %v281, %v475
    %v874 = vmul.f32 %v282, %v479
    %v875 = vmul.f32 %v283, %v483
    %v876 = vmul.f32 %v284, %v487
    %v877 = vmul.f32 %v285, %v491
    %v878 = vmul.f32 %v286, %v495
    %v879 = vmul.f32 %v287, %v499
    %v880 = vmul.f32 %v288, %v503
    %v881 = vmul.f32 %v289, %v507
    %v882 = vmul.f32 %v290, %v511
    %v883 = vmul.f32 %v291, %v515
    %v884 = vmul.f32 %v292, %v519
    %v885 = vmul.f32 %v293, %v523
    %v886 = vmul.f32 %v294, %v527
    %v887 = vmul.f32 %v295, %v531
    %v888 = vmul.f32 %v296, %v535
    %v889 = vmul.f32 %v297, %v539
    %v890 = vmul.f32 %v298, %v543
    %v891 = vmul.f32 %v299, %v547
    %v892 = vmul.f32 %v300, %v551
    %v893 = vmul.f32 %v301, %v555
    %v894 = vmul.f32 %v302, %v559
    %v895 = vmul.f32 %v303, %v563
    %v896 = vmul.f32 %v304, %v567
    %v897 = vmul.f32 %v305, %v571
    %v898 = vmul.f32 %v306, %v575
    %v899 = vmul.f32 %v307, %v579
    %v900 = vld [vmem:[#allocation7] sm:$0xff]
    %v901 = vld [vmem:[#allocation7 + $0x8] sm:$0xff]
    %v902 = vld [vmem:[#allocation7 + $0x10] sm:$0xff]
    %v903 = vld [vmem:[#allocation7 + $0x18] sm:$0xff]
    %v904 = vld [vmem:[#allocation7 + $0x20] sm:$0xff]
    %v905 = vld [vmem:[#allocation7 + $0x28] sm:$0xff]
    %v906 = vld [vmem:[#allocation7 + $0x30] sm:$0xff]
    %v907 = vld [vmem:[#allocation7 + $0x38] sm:$0xff]
    %v916 = vlaneseq
    %v917 = vshrl.u32 %v916, 7
    %v918 = vsub.s32 0, %v917
    %v919 = vrot.slane %v900, %v918
    %v920 = vlaneseq
    %v921 = vshrl.u32 %v920, 7
    %v922 = vsub.s32 1, %v921
    %v923 = vrot.slane %v900, %v922
    %v924 = vlaneseq
    %v925 = vshrl.u32 %v924, 7
    %v926 = vsub.s32 2, %v925
    %v927 = vrot.slane %v900, %v926
    %v928 = vlaneseq
    %v929 = vshrl.u32 %v928, 7
    %v930 = vsub.s32 3, %v929
    %v931 = vrot.slane %v900, %v930
    %v932 = vlaneseq
    %v933 = vshrl.u32 %v932, 7
    %v934 = vsub.s32 4, %v933
    %v935 = vrot.slane %v900, %v934
    %v936 = vlaneseq
    %v937 = vshrl.u32 %v936, 7
    %v938 = vsub.s32 5, %v937
    %v939 = vrot.slane %v900, %v938
    %v940 = vlaneseq
    %v941 = vshrl.u32 %v940, 7
    %v942 = vsub.s32 6, %v941
    %v943 = vrot.slane %v900, %v942
    %v944 = vlaneseq
    %v945 = vshrl.u32 %v944, 7
    %v946 = vsub.s32 7, %v945
    %v947 = vrot.slane %v900, %v946
    %v948 = vlaneseq
    %v949 = vshrl.u32 %v948, 7
    %v950 = vsub.s32 0, %v949
    %v951 = vrot.slane %v901, %v950
    %v952 = vlaneseq
    %v953 = vshrl.u32 %v952, 7
    %v954 = vsub.s32 1, %v953
    %v955 = vrot.slane %v901, %v954
    %v956 = vlaneseq
    %v957 = vshrl.u32 %v956, 7
    %v958 = vsub.s32 2, %v957
    %v959 = vrot.slane %v901, %v958
    %v960 = vlaneseq
    %v961 = vshrl.u32 %v960, 7
    %v962 = vsub.s32 3, %v961
    %v963 = vrot.slane %v901, %v962
    %v964 = vlaneseq
    %v965 = vshrl.u32 %v964, 7
    %v966 = vsub.s32 4, %v965
    %v967 = vrot.slane %v901, %v966
    %v968 = vlaneseq
    %v969 = vshrl.u32 %v968, 7
    %v970 = vsub.s32 5, %v969
    %v971 = vrot.slane %v901, %v970
    %v972 = vlaneseq
    %v973 = vshrl.u32 %v972, 7
    %v974 = vsub.s32 6, %v973
    %v975 = vrot.slane %v901, %v974
    %v976 = vlaneseq
    %v977 = vshrl.u32 %v976, 7
    %v978 = vsub.s32 7, %v977
    %v979 = vrot.slane %v901, %v978
    %v980 = vlaneseq
    %v981 = vshrl.u32 %v980, 7
    %v982 = vsub.s32 0, %v981
    %v983 = vrot.slane %v902, %v982
    %v984 = vlaneseq
    %v985 = vshrl.u32 %v984, 7
    %v986 = vsub.s32 1, %v985
    %v987 = vrot.slane %v902, %v986
    %v988 = vlaneseq
    %v989 = vshrl.u32 %v988, 7
    %v990 = vsub.s32 2, %v989
    %v991 = vrot.slane %v902, %v990
    %v992 = vlaneseq
    %v993 = vshrl.u32 %v992, 7
    %v994 = vsub.s32 3, %v993
    %v995 = vrot.slane %v902, %v994
    %v996 = vlaneseq
    %v997 = vshrl.u32 %v996, 7
    %v998 = vsub.s32 4, %v997
    %v999 = vrot.slane %v902, %v998
    %v1000 = vlaneseq
    %v1001 = vshrl.u32 %v1000, 7
    %v1002 = vsub.s32 5, %v1001
    %v1003 = vrot.slane %v902, %v1002
    %v1004 = vlaneseq
    %v1005 = vshrl.u32 %v1004, 7
    %v1006 = vsub.s32 6, %v1005
    %v1007 = vrot.slane %v902, %v1006
    %v1008 = vlaneseq
    %v1009 = vshrl.u32 %v1008, 7
    %v1010 = vsub.s32 7, %v1009
    %v1011 = vrot.slane %v902, %v1010
    %v1012 = vlaneseq
    %v1013 = vshrl.u32 %v1012, 7
    %v1014 = vsub.s32 0, %v1013
    %v1015 = vrot.slane %v903, %v1014
    %v1016 = vlaneseq
    %v1017 = vshrl.u32 %v1016, 7
    %v1018 = vsub.s32 1, %v1017
    %v1019 = vrot.slane %v903, %v1018
    %v1020 = vlaneseq
    %v1021 = vshrl.u32 %v1020, 7
    %v1022 = vsub.s32 2, %v1021
    %v1023 = vrot.slane %v903, %v1022
    %v1024 = vlaneseq
    %v1025 = vshrl.u32 %v1024, 7
    %v1026 = vsub.s32 3, %v1025
    %v1027 = vrot.slane %v903, %v1026
    %v1028 = vlaneseq
    %v1029 = vshrl.u32 %v1028, 7
    %v1030 = vsub.s32 4, %v1029
    %v1031 = vrot.slane %v903, %v1030
    %v1032 = vlaneseq
    %v1033 = vshrl.u32 %v1032, 7
    %v1034 = vsub.s32 5, %v1033
    %v1035 = vrot.slane %v903, %v1034
    %v1036 = vlaneseq
    %v1037 = vshrl.u32 %v1036, 7
    %v1038 = vsub.s32 6, %v1037
    %v1039 = vrot.slane %v903, %v1038
    %v1040 = vlaneseq
    %v1041 = vshrl.u32 %v1040, 7
    %v1042 = vsub.s32 7, %v1041
    %v1043 = vrot.slane %v903, %v1042
    %v1044 = vlaneseq
    %v1045 = vshrl.u32 %v1044, 7
    %v1046 = vsub.s32 0, %v1045
    %v1047 = vrot.slane %v904, %v1046
    %v1048 = vlaneseq
    %v1049 = vshrl.u32 %v1048, 7
    %v1050 = vsub.s32 1, %v1049
    %v1051 = vrot.slane %v904, %v1050
    %v1052 = vlaneseq
    %v1053 = vshrl.u32 %v1052, 7
    %v1054 = vsub.s32 2, %v1053
    %v1055 = vrot.slane %v904, %v1054
    %v1056 = vlaneseq
    %v1057 = vshrl.u32 %v1056, 7
    %v1058 = vsub.s32 3, %v1057
    %v1059 = vrot.slane %v904, %v1058
    %v1060 = vlaneseq
    %v1061 = vshrl.u32 %v1060, 7
    %v1062 = vsub.s32 4, %v1061
    %v1063 = vrot.slane %v904, %v1062
    %v1064 = vlaneseq
    %v1065 = vshrl.u32 %v1064, 7
    %v1066 = vsub.s32 5, %v1065
    %v1067 = vrot.slane %v904, %v1066
    %v1068 = vlaneseq
    %v1069 = vshrl.u32 %v1068, 7
    %v1070 = vsub.s32 6, %v1069
    %v1071 = vrot.slane %v904, %v1070
    %v1072 = vlaneseq
    %v1073 = vshrl.u32 %v1072, 7
    %v1074 = vsub.s32 7, %v1073
    %v1075 = vrot.slane %v904, %v1074
    %v1076 = vlaneseq
    %v1077 = vshrl.u32 %v1076, 7
    %v1078 = vsub.s32 0, %v1077
    %v1079 = vrot.slane %v905, %v1078
    %v1080 = vlaneseq
    %v1081 = vshrl.u32 %v1080, 7
    %v1082 = vsub.s32 1, %v1081
    %v1083 = vrot.slane %v905, %v1082
    %v1084 = vlaneseq
    %v1085 = vshrl.u32 %v1084, 7
    %v1086 = vsub.s32 2, %v1085
    %v1087 = vrot.slane %v905, %v1086
    %v1088 = vlaneseq
    %v1089 = vshrl.u32 %v1088, 7
    %v1090 = vsub.s32 3, %v1089
    %v1091 = vrot.slane %v905, %v1090
    %v1092 = vlaneseq
    %v1093 = vshrl.u32 %v1092, 7
    %v1094 = vsub.s32 4, %v1093
    %v1095 = vrot.slane %v905, %v1094
    %v1096 = vlaneseq
    %v1097 = vshrl.u32 %v1096, 7
    %v1098 = vsub.s32 5, %v1097
    %v1099 = vrot.slane %v905, %v1098
    %v1100 = vlaneseq
    %v1101 = vshrl.u32 %v1100, 7
    %v1102 = vsub.s32 6, %v1101
    %v1103 = vrot.slane %v905, %v1102
    %v1104 = vlaneseq
    %v1105 = vshrl.u32 %v1104, 7
    %v1106 = vsub.s32 7, %v1105
    %v1107 = vrot.slane %v905, %v1106
    %v1108 = vlaneseq
    %v1109 = vshrl.u32 %v1108, 7
    %v1110 = vsub.s32 0, %v1109
    %v1111 = vrot.slane %v906, %v1110
    %v1112 = vlaneseq
    %v1113 = vshrl.u32 %v1112, 7
    %v1114 = vsub.s32 1, %v1113
    %v1115 = vrot.slane %v906, %v1114
    %v1116 = vlaneseq
    %v1117 = vshrl.u32 %v1116, 7
    %v1118 = vsub.s32 2, %v1117
    %v1119 = vrot.slane %v906, %v1118
    %v1120 = vlaneseq
    %v1121 = vshrl.u32 %v1120, 7
    %v1122 = vsub.s32 3, %v1121
    %v1123 = vrot.slane %v906, %v1122
    %v1124 = vlaneseq
    %v1125 = vshrl.u32 %v1124, 7
    %v1126 = vsub.s32 4, %v1125
    %v1127 = vrot.slane %v906, %v1126
    %v1128 = vlaneseq
    %v1129 = vshrl.u32 %v1128, 7
    %v1130 = vsub.s32 5, %v1129
    %v1131 = vrot.slane %v906, %v1130
    %v1132 = vlaneseq
    %v1133 = vshrl.u32 %v1132, 7
    %v1134 = vsub.s32 6, %v1133
    %v1135 = vrot.slane %v906, %v1134
    %v1136 = vlaneseq
    %v1137 = vshrl.u32 %v1136, 7
    %v1138 = vsub.s32 7, %v1137
    %v1139 = vrot.slane %v906, %v1138
    %v1140 = vlaneseq
    %v1141 = vshrl.u32 %v1140, 7
    %v1142 = vsub.s32 0, %v1141
    %v1143 = vrot.slane %v907, %v1142
    %v1144 = vlaneseq
    %v1145 = vshrl.u32 %v1144, 7
    %v1146 = vsub.s32 1, %v1145
    %v1147 = vrot.slane %v907, %v1146
    %v1148 = vlaneseq
    %v1149 = vshrl.u32 %v1148, 7
    %v1150 = vsub.s32 2, %v1149
    %v1151 = vrot.slane %v907, %v1150
    %v1152 = vlaneseq
    %v1153 = vshrl.u32 %v1152, 7
    %v1154 = vsub.s32 3, %v1153
    %v1155 = vrot.slane %v907, %v1154
    %v1156 = vlaneseq
    %v1157 = vshrl.u32 %v1156, 7
    %v1158 = vsub.s32 4, %v1157
    %v1159 = vrot.slane %v907, %v1158
    %v1160 = vlaneseq
    %v1161 = vshrl.u32 %v1160, 7
    %v1162 = vsub.s32 5, %v1161
    %v1163 = vrot.slane %v907, %v1162
    %v1164 = vlaneseq
    %v1165 = vshrl.u32 %v1164, 7
    %v1166 = vsub.s32 6, %v1165
    %v1167 = vrot.slane %v907, %v1166
    %v1168 = vlaneseq
    %v1169 = vshrl.u32 %v1168, 7
    %v1170 = vsub.s32 7, %v1169
    %v1171 = vrot.slane %v907, %v1170
    %v1236 = vadd.f32 %v644, %v919
    %v1237 = vadd.f32 %v645, %v923
    %v1238 = vadd.f32 %v646, %v927
    %v1239 = vadd.f32 %v647, %v931
    %v1240 = vadd.f32 %v648, %v935
    %v1241 = vadd.f32 %v649, %v939
    %v1242 = vadd.f32 %v650, %v943
    %v1243 = vadd.f32 %v651, %v947
    %v1244 = vadd.f32 %v652, %v951
    %v1245 = vadd.f32 %v653, %v955
    %v1246 = vadd.f32 %v654, %v959
    %v1247 = vadd.f32 %v655, %v963
    %v1248 = vadd.f32 %v656, %v967
    %v1249 = vadd.f32 %v657, %v971
    %v1250 = vadd.f32 %v658, %v975
    %v1251 = vadd.f32 %v659, %v979
    %v1252 = vadd.f32 %v660, %v983
    %v1253 = vadd.f32 %v661, %v987
    %v1254 = vadd.f32 %v662, %v991
    %v1255 = vadd.f32 %v663, %v995
    %v1256 = vadd.f32 %v664, %v999
    %v1257 = vadd.f32 %v665, %v1003
    %v1258 = vadd.f32 %v666, %v1007
    %v1259 = vadd.f32 %v667, %v1011
    %v1260 = vadd.f32 %v668, %v1015
    %v1261 = vadd.f32 %v669, %v1019
    %v1262 = vadd.f32 %v670, %v1023
    %v1263 = vadd.f32 %v671, %v1027
    %v1264 = vadd.f32 %v672, %v1031
    %v1265 = vadd.f32 %v673, %v1035
    %v1266 = vadd.f32 %v674, %v1039
    %v1267 = vadd.f32 %v675, %v1043
    %v1268 = vadd.f32 %v676, %v1047
    %v1269 = vadd.f32 %v677, %v1051
    %v1270 = vadd.f32 %v678, %v1055
    %v1271 = vadd.f32 %v679, %v1059
    %v1272 = vadd.f32 %v680, %v1063
    %v1273 = vadd.f32 %v681, %v1067
    %v1274 = vadd.f32 %v682, %v1071
    %v1275 = vadd.f32 %v683, %v1075
    %v1276 = vadd.f32 %v684, %v1079
    %v1277 = vadd.f32 %v685, %v1083
    %v1278 = vadd.f32 %v686, %v1087
    %v1279 = vadd.f32 %v687, %v1091
    %v1280 = vadd.f32 %v688, %v1095
    %v1281 = vadd.f32 %v689, %v1099
    %v1282 = vadd.f32 %v690, %v1103
    %v1283 = vadd.f32 %v691, %v1107
    %v1284 = vadd.f32 %v692, %v1111
    %v1285 = vadd.f32 %v693, %v1115
    %v1286 = vadd.f32 %v694, %v1119
    %v1287 = vadd.f32 %v695, %v1123
    %v1288 = vadd.f32 %v696, %v1127
    %v1289 = vadd.f32 %v697, %v1131
    %v1290 = vadd.f32 %v698, %v1135
    %v1291 = vadd.f32 %v699, %v1139
    %v1292 = vadd.f32 %v700, %v1143
    %v1293 = vadd.f32 %v701, %v1147
    %v1294 = vadd.f32 %v702, %v1151
    %v1295 = vadd.f32 %v703, %v1155
    %v1296 = vadd.f32 %v704, %v1159
    %v1297 = vadd.f32 %v705, %v1163
    %v1298 = vadd.f32 %v706, %v1167
    %v1299 = vadd.f32 %v707, %v1171
    %v1300 = vadd.f32 %v708, %v919
    %v1301 = vadd.f32 %v709, %v923
    %v1302 = vadd.f32 %v710, %v927
    %v1303 = vadd.f32 %v711, %v931
    %v1304 = vadd.f32 %v712, %v935
    %v1305 = vadd.f32 %v713, %v939
    %v1306 = vadd.f32 %v714, %v943
    %v1307 = vadd.f32 %v715, %v947
    %v1308 = vadd.f32 %v716, %v951
    %v1309 = vadd.f32 %v717, %v955
    %v1310 = vadd.f32 %v718, %v959
    %v1311 = vadd.f32 %v719, %v963
    %v1312 = vadd.f32 %v720, %v967
    %v1313 = vadd.f32 %v721, %v971
    %v1314 = vadd.f32 %v722, %v975
    %v1315 = vadd.f32 %v723, %v979
    %v1316 = vadd.f32 %v724, %v983
    %v1317 = vadd.f32 %v725, %v987
    %v1318 = vadd.f32 %v726, %v991
    %v1319 = vadd.f32 %v727, %v995
    %v1320 = vadd.f32 %v728, %v999
    %v1321 = vadd.f32 %v729, %v1003
    %v1322 = vadd.f32 %v730, %v1007
    %v1323 = vadd.f32 %v731, %v1011
    %v1324 = vadd.f32 %v732, %v1015
    %v1325 = vadd.f32 %v733, %v1019
    %v1326 = vadd.f32 %v734, %v1023
    %v1327 = vadd.f32 %v735, %v1027
    %v1328 = vadd.f32 %v736, %v1031
    %v1329 = vadd.f32 %v737, %v1035
    %v1330 = vadd.f32 %v738, %v1039
    %v1331 = vadd.f32 %v739, %v1043
    %v1332 = vadd.f32 %v740, %v1047
    %v1333 = vadd.f32 %v741, %v1051
    %v1334 = vadd.f32 %v742, %v1055
    %v1335 = vadd.f32 %v743, %v1059
    %v1336 = vadd.f32 %v744, %v1063
    %v1337 = vadd.f32 %v745, %v1067
    %v1338 = vadd.f32 %v746, %v1071
    %v1339 = vadd.f32 %v747, %v1075
    %v1340 = vadd.f32 %v748, %v1079
    %v1341 = vadd.f32 %v749, %v1083
    %v1342 = vadd.f32 %v750, %v1087
    %v1343 = vadd.f32 %v751, %v1091
    %v1344 = vadd.f32 %v752, %v1095
    %v1345 = vadd.f32 %v753, %v1099
    %v1346 = vadd.f32 %v754, %v1103
    %v1347 = vadd.f32 %v755, %v1107
    %v1348 = vadd.f32 %v756, %v1111
    %v1349 = vadd.f32 %v757, %v1115
    %v1350 = vadd.f32 %v758, %v1119
    %v1351 = vadd.f32 %v759, %v1123
    %v1352 = vadd.f32 %v760, %v1127
    %v1353 = vadd.f32 %v761, %v1131
    %v1354 = vadd.f32 %v762, %v1135
    %v1355 = vadd.f32 %v763, %v1139
    %v1356 = vadd.f32 %v764, %v1143
    %v1357 = vadd.f32 %v765, %v1147
    %v1358 = vadd.f32 %v766, %v1151
    %v1359 = vadd.f32 %v767, %v1155
    %v1360 = vadd.f32 %v768, %v1159
    %v1361 = vadd.f32 %v769, %v1163
    %v1362 = vadd.f32 %v770, %v1167
    %v1363 = vadd.f32 %v771, %v1171
    %v1364 = vadd.f32 %v772, %v919
    %v1365 = vadd.f32 %v773, %v923
    %v1366 = vadd.f32 %v774, %v927
    %v1367 = vadd.f32 %v775, %v931
    %v1368 = vadd.f32 %v776, %v935
    %v1369 = vadd.f32 %v777, %v939
    %v1370 = vadd.f32 %v778, %v943
    %v1371 = vadd.f32 %v779, %v947
    %v1372 = vadd.f32 %v780, %v951
    %v1373 = vadd.f32 %v781, %v955
    %v1374 = vadd.f32 %v782, %v959
    %v1375 = vadd.f32 %v783, %v963
    %v1376 = vadd.f32 %v784, %v967
    %v1377 = vadd.f32 %v785, %v971
    %v1378 = vadd.f32 %v786, %v975
    %v1379 = vadd.f32 %v787, %v979
    %v1380 = vadd.f32 %v788, %v983
    %v1381 = vadd.f32 %v789, %v987
    %v1382 = vadd.f32 %v790, %v991
    %v1383 = vadd.f32 %v791, %v995
    %v1384 = vadd.f32 %v792, %v999
    %v1385 = vadd.f32 %v793, %v1003
    %v1386 = vadd.f32 %v794, %v1007
    %v1387 = vadd.f32 %v795, %v1011
    %v1388 = vadd.f32 %v796, %v1015
    %v1389 = vadd.f32 %v797, %v1019
    %v1390 = vadd.f32 %v798, %v1023
    %v1391 = vadd.f32 %v799, %v1027
    %v1392 = vadd.f32 %v800, %v1031
    %v1393 = vadd.f32 %v801, %v1035
    %v1394 = vadd.f32 %v802, %v1039
    %v1395 = vadd.f32 %v803, %v1043
    %v1396 = vadd.f32 %v804, %v1047
    %v1397 = vadd.f32 %v805, %v1051
    %v1398 = vadd.f32 %v806, %v1055
    %v1399 = vadd.f32 %v807, %v1059
    %v1400 = vadd.f32 %v808, %v1063
    %v1401 = vadd.f32 %v809, %v1067
    %v1402 = vadd.f32 %v810, %v1071
    %v1403 = vadd.f32 %v811, %v1075
    %v1404 = vadd.f32 %v812, %v1079
    %v1405 = vadd.f32 %v813, %v1083
    %v1406 = vadd.f32 %v814, %v1087
    %v1407 = vadd.f32 %v815, %v1091
    %v1408 = vadd.f32 %v816, %v1095
    %v1409 = vadd.f32 %v817, %v1099
    %v1410 = vadd.f32 %v818, %v1103
    %v1411 = vadd.f32 %v819, %v1107
    %v1412 = vadd.f32 %v820, %v1111
    %v1413 = vadd.f32 %v821, %v1115
    %v1414 = vadd.f32 %v822, %v1119
    %v1415 = vadd.f32 %v823, %v1123
    %v1416 = vadd.f32 %v824, %v1127
    %v1417 = vadd.f32 %v825, %v1131
    %v1418 = vadd.f32 %v826, %v1135
    %v1419 = vadd.f32 %v827, %v1139
    %v1420 = vadd.f32 %v828, %v1143
    %v1421 = vadd.f32 %v829, %v1147
    %v1422 = vadd.f32 %v830, %v1151
    %v1423 = vadd.f32 %v831, %v1155
    %v1424 = vadd.f32 %v832, %v1159
    %v1425 = vadd.f32 %v833, %v1163
    %v1426 = vadd.f32 %v834, %v1167
    %v1427 = vadd.f32 %v835, %v1171
    %v1428 = vadd.f32 %v836, %v919
    %v1429 = vadd.f32 %v837, %v923
    %v1430 = vadd.f32 %v838, %v927
    %v1431 = vadd.f32 %v839, %v931
    %v1432 = vadd.f32 %v840, %v935
    %v1433 = vadd.f32 %v841, %v939
    %v1434 = vadd.f32 %v842, %v943
    %v1435 = vadd.f32 %v843, %v947
    %v1436 = vadd.f32 %v844, %v951
    %v1437 = vadd.f32 %v845, %v955
    %v1438 = vadd.f32 %v846, %v959
    %v1439 = vadd.f32 %v847, %v963
    %v1440 = vadd.f32 %v848, %v967
    %v1441 = vadd.f32 %v849, %v971
    %v1442 = vadd.f32 %v850, %v975
    %v1443 = vadd.f32 %v851, %v979
    %v1444 = vadd.f32 %v852, %v983
    %v1445 = vadd.f32 %v853, %v987
    %v1446 = vadd.f32 %v854, %v991
    %v1447 = vadd.f32 %v855, %v995
    %v1448 = vadd.f32 %v856, %v999
    %v1449 = vadd.f32 %v857, %v1003
    %v1450 = vadd.f32 %v858, %v1007
    %v1451 = vadd.f32 %v859, %v1011
    %v1452 = vadd.f32 %v860, %v1015
    %v1453 = vadd.f32 %v861, %v1019
    %v1454 = vadd.f32 %v862, %v1023
    %v1455 = vadd.f32 %v863, %v1027
    %v1456 = vadd.f32 %v864, %v1031
    %v1457 = vadd.f32 %v865, %v1035
    %v1458 = vadd.f32 %v866, %v1039
    %v1459 = vadd.f32 %v867, %v1043
    %v1460 = vadd.f32 %v868, %v1047
    %v1461 = vadd.f32 %v869, %v1051
    %v1462 = vadd.f32 %v870, %v1055
    %v1463 = vadd.f32 %v871, %v1059
    %v1464 = vadd.f32 %v872, %v1063
    %v1465 = vadd.f32 %v873, %v1067
    %v1466 = vadd.f32 %v874, %v1071
    %v1467 = vadd.f32 %v875, %v1075
    %v1468 = vadd.f32 %v876, %v1079
    %v1469 = vadd.f32 %v877, %v1083
    %v1470 = vadd.f32 %v878, %v1087
    %v1471 = vadd.f32 %v879, %v1091
    %v1472 = vadd.f32 %v880, %v1095
    %v1473 = vadd.f32 %v881, %v1099
    %v1474 = vadd.f32 %v882, %v1103
    %v1475 = vadd.f32 %v883, %v1107
    %v1476 = vadd.f32 %v884, %v1111
    %v1477 = vadd.f32 %v885, %v1115
    %v1478 = vadd.f32 %v886, %v1119
    %v1479 = vadd.f32 %v887, %v1123
    %v1480 = vadd.f32 %v888, %v1127
    %v1481 = vadd.f32 %v889, %v1131
    %v1482 = vadd.f32 %v890, %v1135
    %v1483 = vadd.f32 %v891, %v1139
    %v1484 = vadd.f32 %v892, %v1143
    %v1485 = vadd.f32 %v893, %v1147
    %v1486 = vadd.f32 %v894, %v1151
    %v1487 = vadd.f32 %v895, %v1155
    %v1488 = vadd.f32 %v896, %v1159
    %v1489 = vadd.f32 %v897, %v1163
    %v1490 = vadd.f32 %v898, %v1167
    %v1491 = vadd.f32 %v899, %v1171
    %1492 = vst [vmem:[#allocation8] sm:$0xff] %v1236
    %1493 = vst [vmem:[#allocation8 + $0x8] sm:$0xff] %v1237
    %1494 = vst [vmem:[#allocation8 + $0x10] sm:$0xff] %v1238
    %1495 = vst [vmem:[#allocation8 + $0x18] sm:$0xff] %v1239
    %1496 = vst [vmem:[#allocation8 + $0x20] sm:$0xff] %v1240
    %1497 = vst [vmem:[#allocation8 + $0x28] sm:$0xff] %v1241
    %1498 = vst [vmem:[#allocation8 + $0x30] sm:$0xff] %v1242
    %1499 = vst [vmem:[#allocation8 + $0x38] sm:$0xff] %v1243
    %1500 = vst [vmem:[#allocation8 + $0x40] sm:$0xff] %v1244
    %1501 = vst [vmem:[#allocation8 + $0x48] sm:$0xff] %v1245
    %1502 = vst [vmem:[#allocation8 + $0x50] sm:$0xff] %v1246
    %1503 = vst [vmem:[#allocation8 + $0x58] sm:$0xff] %v1247
    %1504 = vst [vmem:[#allocation8 + $0x60] sm:$0xff] %v1248
    %1505 = vst [vmem:[#allocation8 + $0x68] sm:$0xff] %v1249
    %1506 = vst [vmem:[#allocation8 + $0x70] sm:$0xff] %v1250
    %1507 = vst [vmem:[#allocation8 + $0x78] sm:$0xff] %v1251
    %1508 = vst [vmem:[#allocation8 + $0x80] sm:$0xff] %v1252
    %1509 = vst [vmem:[#allocation8 + $0x88] sm:$0xff] %v1253
    %1510 = vst [vmem:[#allocation8 + $0x90] sm:$0xff] %v1254
    %1511 = vst [vmem:[#allocation8 + $0x98] sm:$0xff] %v1255
    %1512 = vst [vmem:[#allocation8 + $0xa0] sm:$0xff] %v1256
    %1513 = vst [vmem:[#allocation8 + $0xa8] sm:$0xff] %v1257
    %1514 = vst [vmem:[#allocation8 + $0xb0] sm:$0xff] %v1258
    %1515 = vst [vmem:[#allocation8 + $0xb8] sm:$0xff] %v1259
    %1516 = vst [vmem:[#allocation8 + $0xc0] sm:$0xff] %v1260
    %1517 = vst [vmem:[#allocation8 + $0xc8] sm:$0xff] %v1261
    %1518 = vst [vmem:[#allocation8 + $0xd0] sm:$0xff] %v1262
    %1519 = vst [vmem:[#allocation8 + $0xd8] sm:$0xff] %v1263
    %1520 = vst [vmem:[#allocation8 + $0xe0] sm:$0xff] %v1264
    %1521 = vst [vmem:[#allocation8 + $0xe8] sm:$0xff] %v1265
    %1522 = vst [vmem:[#allocation8 + $0xf0] sm:$0xff] %v1266
    %1523 = vst [vmem:[#allocation8 + $0xf8] sm:$0xff] %v1267
    %1524 = vst [vmem:[#allocation8 + $0x100] sm:$0xff] %v1268
    %1525 = vst [vmem:[#allocation8 + $0x108] sm:$0xff] %v1269
    %1526 = vst [vmem:[#allocation8 + $0x110] sm:$0xff] %v1270
    %1527 = vst [vmem:[#allocation8 + $0x118] sm:$0xff] %v1271
    %1528 = vst [vmem:[#allocation8 + $0x120] sm:$0xff] %v1272
    %1529 = vst [vmem:[#allocation8 + $0x128] sm:$0xff] %v1273
    %1530 = vst [vmem:[#allocation8 + $0x130] sm:$0xff] %v1274
    %1531 = vst [vmem:[#allocation8 + $0x138] sm:$0xff] %v1275
    %1532 = vst [vmem:[#allocation8 + $0x140] sm:$0xff] %v1276
    %1533 = vst [vmem:[#allocation8 + $0x148] sm:$0xff] %v1277
    %1534 = vst [vmem:[#allocation8 + $0x150] sm:$0xff] %v1278
    %1535 = vst [vmem:[#allocation8 + $0x158] sm:$0xff] %v1279
    %1536 = vst [vmem:[#allocation8 + $0x160] sm:$0xff] %v1280
    %1537 = vst [vmem:[#allocation8 + $0x168] sm:$0xff] %v1281
    %1538 = vst [vmem:[#allocation8 + $0x170] sm:$0xff] %v1282
    %1539 = vst [vmem:[#allocation8 + $0x178] sm:$0xff] %v1283
    %1540 = vst [vmem:[#allocation8 + $0x180] sm:$0xff] %v1284
    %1541 = vst [vmem:[#allocation8 + $0x188] sm:$0xff] %v1285
    %1542 = vst [vmem:[#allocation8 + $0x190] sm:$0xff] %v1286
    %1543 = vst [vmem:[#allocation8 + $0x198] sm:$0xff] %v1287
    %1544 = vst [vmem:[#allocation8 + $0x1a0] sm:$0xff] %v1288
    %1545 = vst [vmem:[#allocation8 + $0x1a8] sm:$0xff] %v1289
    %1546 = vst [vmem:[#allocation8 + $0x1b0] sm:$0xff] %v1290
    %1547 = vst [vmem:[#allocation8 + $0x1b8] sm:$0xff] %v1291
    %1548 = vst [vmem:[#allocation8 + $0x1c0] sm:$0xff] %v1292
    %1549 = vst [vmem:[#allocation8 + $0x1c8] sm:$0xff] %v1293
    %1550 = vst [vmem:[#allocation8 + $0x1d0] sm:$0xff] %v1294
    %1551 = vst [vmem:[#allocation8 + $0x1d8] sm:$0xff] %v1295
    %1552 = vst [vmem:[#allocation8 + $0x1e0] sm:$0xff] %v1296
    %1553 = vst [vmem:[#allocation8 + $0x1e8] sm:$0xff] %v1297
    %1554 = vst [vmem:[#allocation8 + $0x1f0] sm:$0xff] %v1298
    %1555 = vst [vmem:[#allocation8 + $0x1f8] sm:$0xff] %v1299
    %1556 = vst [vmem:[#allocation8 + $0x200] sm:$0xff] %v1300
    %1557 = vst [vmem:[#allocation8 + $0x208] sm:$0xff] %v1301
    %1558 = vst [vmem:[#allocation8 + $0x210] sm:$0xff] %v1302
    %1559 = vst [vmem:[#allocation8 + $0x218] sm:$0xff] %v1303
    %1560 = vst [vmem:[#allocation8 + $0x220] sm:$0xff] %v1304
    %1561 = vst [vmem:[#allocation8 + $0x228] sm:$0xff] %v1305
    %1562 = vst [vmem:[#allocation8 + $0x230] sm:$0xff] %v1306
    %1563 = vst [vmem:[#allocation8 + $0x238] sm:$0xff] %v1307
    %1564 = vst [vmem:[#allocation8 + $0x240] sm:$0xff] %v1308
    %1565 = vst [vmem:[#allocation8 + $0x248] sm:$0xff] %v1309
    %1566 = vst [vmem:[#allocation8 + $0x250] sm:$0xff] %v1310
    %1567 = vst [vmem:[#allocation8 + $0x258] sm:$0xff] %v1311
    %1568 = vst [vmem:[#allocation8 + $0x260] sm:$0xff] %v1312
    %1569 = vst [vmem:[#allocation8 + $0x268] sm:$0xff] %v1313
    %1570 = vst [vmem:[#allocation8 + $0x270] sm:$0xff] %v1314
    %1571 = vst [vmem:[#allocation8 + $0x278] sm:$0xff] %v1315
    %1572 = vst [vmem:[#allocation8 + $0x280] sm:$0xff] %v1316
    %1573 = vst [vmem:[#allocation8 + $0x288] sm:$0xff] %v1317
    %1574 = vst [vmem:[#allocation8 + $0x290] sm:$0xff] %v1318
    %1575 = vst [vmem:[#allocation8 + $0x298] sm:$0xff] %v1319
    %1576 = vst [vmem:[#allocation8 + $0x2a0] sm:$0xff] %v1320
    %1577 = vst [vmem:[#allocation8 + $0x2a8] sm:$0xff] %v1321
    %1578 = vst [vmem:[#allocation8 + $0x2b0] sm:$0xff] %v1322
    %1579 = vst [vmem:[#allocation8 + $0x2b8] sm:$0xff] %v1323
    %1580 = vst [vmem:[#allocation8 + $0x2c0] sm:$0xff] %v1324
    %1581 = vst [vmem:[#allocation8 + $0x2c8] sm:$0xff] %v1325
    %1582 = vst [vmem:[#allocation8 + $0x2d0] sm:$0xff] %v1326
    %1583 = vst [vmem:[#allocation8 + $0x2d8] sm:$0xff] %v1327
    %1584 = vst [vmem:[#allocation8 + $0x2e0] sm:$0xff] %v1328
    %1585 = vst [vmem:[#allocation8 + $0x2e8] sm:$0xff] %v1329
    %1586 = vst [vmem:[#allocation8 + $0x2f0] sm:$0xff] %v1330
    %1587 = vst [vmem:[#allocation8 + $0x2f8] sm:$0xff] %v1331
    %1588 = vst [vmem:[#allocation8 + $0x300] sm:$0xff] %v1332
    %1589 = vst [vmem:[#allocation8 + $0x308] sm:$0xff] %v1333
    %1590 = vst [vmem:[#allocation8 + $0x310] sm:$0xff] %v1334
    %1591 = vst [vmem:[#allocation8 + $0x318] sm:$0xff] %v1335
    %1592 = vst [vmem:[#allocation8 + $0x320] sm:$0xff] %v1336
    %1593 = vst [vmem:[#allocation8 + $0x328] sm:$0xff] %v1337
    %1594 = vst [vmem:[#allocation8 + $0x330] sm:$0xff] %v1338
    %1595 = vst [vmem:[#allocation8 + $0x338] sm:$0xff] %v1339
    %1596 = vst [vmem:[#allocation8 + $0x340] sm:$0xff] %v1340
    %1597 = vst [vmem:[#allocation8 + $0x348] sm:$0xff] %v1341
    %1598 = vst [vmem:[#allocation8 + $0x350] sm:$0xff] %v1342
    %1599 = vst [vmem:[#allocation8 + $0x358] sm:$0xff] %v1343
    %1600 = vst [vmem:[#allocation8 + $0x360] sm:$0xff] %v1344
    %1601 = vst [vmem:[#allocation8 + $0x368] sm:$0xff] %v1345
    %1602 = vst [vmem:[#allocation8 + $0x370] sm:$0xff] %v1346
    %1603 = vst [vmem:[#allocation8 + $0x378] sm:$0xff] %v1347
    %1604 = vst [vmem:[#allocation8 + $0x380] sm:$0xff] %v1348
    %1605 = vst [vmem:[#allocation8 + $0x388] sm:$0xff] %v1349
    %1606 = vst [vmem:[#allocation8 + $0x390] sm:$0xff] %v1350
    %1607 = vst [vmem:[#allocation8 + $0x398] sm:$0xff] %v1351
    %1608 = vst [vmem:[#allocation8 + $0x3a0] sm:$0xff] %v1352
    %1609 = vst [vmem:[#allocation8 + $0x3a8] sm:$0xff] %v1353
    %1610 = vst [vmem:[#allocation8 + $0x3b0] sm:$0xff] %v1354
    %1611 = vst [vmem:[#allocation8 + $0x3b8] sm:$0xff] %v1355
    %1612 = vst [vmem:[#allocation8 + $0x3c0] sm:$0xff] %v1356
    %1613 = vst [vmem:[#allocation8 + $0x3c8] sm:$0xff] %v1357
    %1614 = vst [vmem:[#allocation8 + $0x3d0] sm:$0xff] %v1358
    %1615 = vst [vmem:[#allocation8 + $0x3d8] sm:$0xff] %v1359
    %1616 = vst [vmem:[#allocation8 + $0x3e0] sm:$0xff] %v1360
    %1617 = vst [vmem:[#allocation8 + $0x3e8] sm:$0xff] %v1361
    %1618 = vst [vmem:[#allocation8 + $0x3f0] sm:$0xff] %v1362
    %1619 = vst [vmem:[#allocation8 + $0x3f8] sm:$0xff] %v1363
    %1620 = vst [vmem:[#allocation8 + $0x400] sm:$0xff] %v1364
    %1621 = vst [vmem:[#allocation8 + $0x408] sm:$0xff] %v1365
    %1622 = vst [vmem:[#allocation8 + $0x410] sm:$0xff] %v1366
    %1623 = vst [vmem:[#allocation8 + $0x418] sm:$0xff] %v1367
    %1624 = vst [vmem:[#allocation8 + $0x420] sm:$0xff] %v1368
    %1625 = vst [vmem:[#allocation8 + $0x428] sm:$0xff] %v1369
    %1626 = vst [vmem:[#allocation8 + $0x430] sm:$0xff] %v1370
    %1627 = vst [vmem:[#allocation8 + $0x438] sm:$0xff] %v1371
    %1628 = vst [vmem:[#allocation8 + $0x440] sm:$0xff] %v1372
    %1629 = vst [vmem:[#allocation8 + $0x448] sm:$0xff] %v1373
    %1630 = vst [vmem:[#allocation8 + $0x450] sm:$0xff] %v1374
    %1631 = vst [vmem:[#allocation8 + $0x458] sm:$0xff] %v1375
    %1632 = vst [vmem:[#allocation8 + $0x460] sm:$0xff] %v1376
    %1633 = vst [vmem:[#allocation8 + $0x468] sm:$0xff] %v1377
    %1634 = vst [vmem:[#allocation8 + $0x470] sm:$0xff] %v1378
    %1635 = vst [vmem:[#allocation8 + $0x478] sm:$0xff] %v1379
    %1636 = vst [vmem:[#allocation8 + $0x480] sm:$0xff] %v1380
    %1637 = vst [vmem:[#allocation8 + $0x488] sm:$0xff] %v1381
    %1638 = vst [vmem:[#allocation8 + $0x490] sm:$0xff] %v1382
    %1639 = vst [vmem:[#allocation8 + $0x498] sm:$0xff] %v1383
    %1640 = vst [vmem:[#allocation8 + $0x4a0] sm:$0xff] %v1384
    %1641 = vst [vmem:[#allocation8 + $0x4a8] sm:$0xff] %v1385
    %1642 = vst [vmem:[#allocation8 + $0x4b0] sm:$0xff] %v1386
    %1643 = vst [vmem:[#allocation8 + $0x4b8] sm:$0xff] %v1387
    %1644 = vst [vmem:[#allocation8 + $0x4c0] sm:$0xff] %v1388
    %1645 = vst [vmem:[#allocation8 + $0x4c8] sm:$0xff] %v1389
    %1646 = vst [vmem:[#allocation8 + $0x4d0] sm:$0xff] %v1390
    %1647 = vst [vmem:[#allocation8 + $0x4d8] sm:$0xff] %v1391
    %1648 = vst [vmem:[#allocation8 + $0x4e0] sm:$0xff] %v1392
    %1649 = vst [vmem:[#allocation8 + $0x4e8] sm:$0xff] %v1393
    %1650 = vst [vmem:[#allocation8 + $0x4f0] sm:$0xff] %v1394
    %1651 = vst [vmem:[#allocation8 + $0x4f8] sm:$0xff] %v1395
    %1652 = vst [vmem:[#allocation8 + $0x500] sm:$0xff] %v1396
    %1653 = vst [vmem:[#allocation8 + $0x508] sm:$0xff] %v1397
    %1654 = vst [vmem:[#allocation8 + $0x510] sm:$0xff] %v1398
    %1655 = vst [vmem:[#allocation8 + $0x518] sm:$0xff] %v1399
    %1656 = vst [vmem:[#allocation8 + $0x520] sm:$0xff] %v1400
    %1657 = vst [vmem:[#allocation8 + $0x528] sm:$0xff] %v1401
    %1658 = vst [vmem:[#allocation8 + $0x530] sm:$0xff] %v1402
    %1659 = vst [vmem:[#allocation8 + $0x538] sm:$0xff] %v1403
    %1660 = vst [vmem:[#allocation8 + $0x540] sm:$0xff] %v1404
    %1661 = vst [vmem:[#allocation8 + $0x548] sm:$0xff] %v1405
    %1662 = vst [vmem:[#allocation8 + $0x550] sm:$0xff] %v1406
    %1663 = vst [vmem:[#allocation8 + $0x558] sm:$0xff] %v1407
    %1664 = vst [vmem:[#allocation8 + $0x560] sm:$0xff] %v1408
    %1665 = vst [vmem:[#allocation8 + $0x568] sm:$0xff] %v1409
    %1666 = vst [vmem:[#allocation8 + $0x570] sm:$0xff] %v1410
    %1667 = vst [vmem:[#allocation8 + $0x578] sm:$0xff] %v1411
    %1668 = vst [vmem:[#allocation8 + $0x580] sm:$0xff] %v1412
    %1669 = vst [vmem:[#allocation8 + $0x588] sm:$0xff] %v1413
    %1670 = vst [vmem:[#allocation8 + $0x590] sm:$0xff] %v1414
    %1671 = vst [vmem:[#allocation8 + $0x598] sm:$0xff] %v1415
    %1672 = vst [vmem:[#allocation8 + $0x5a0] sm:$0xff] %v1416
    %1673 = vst [vmem:[#allocation8 + $0x5a8] sm:$0xff] %v1417
    %1674 = vst [vmem:[#allocation8 + $0x5b0] sm:$0xff] %v1418
    %1675 = vst [vmem:[#allocation8 + $0x5b8] sm:$0xff] %v1419
    %1676 = vst [vmem:[#allocation8 + $0x5c0] sm:$0xff] %v1420
    %1677 = vst [vmem:[#allocation8 + $0x5c8] sm:$0xff] %v1421
    %1678 = vst [vmem:[#allocation8 + $0x5d0] sm:$0xff] %v1422
    %1679 = vst [vmem:[#allocation8 + $0x5d8] sm:$0xff] %v1423
    %1680 = vst [vmem:[#allocation8 + $0x5e0] sm:$0xff] %v1424
    %1681 = vst [vmem:[#allocation8 + $0x5e8] sm:$0xff] %v1425
    %1682 = vst [vmem:[#allocation8 + $0x5f0] sm:$0xff] %v1426
    %1683 = vst [vmem:[#allocation8 + $0x5f8] sm:$0xff] %v1427
    %1684 = vst [vmem:[#allocation8 + $0x600] sm:$0xff] %v1428
    %1685 = vst [vmem:[#allocation8 + $0x608] sm:$0xff] %v1429
    %1686 = vst [vmem:[#allocation8 + $0x610] sm:$0xff] %v1430
    %1687 = vst [vmem:[#allocation8 + $0x618] sm:$0xff] %v1431
    %1688 = vst [vmem:[#allocation8 + $0x620] sm:$0xff] %v1432
    %1689 = vst [vmem:[#allocation8 + $0x628] sm:$0xff] %v1433
    %1690 = vst [vmem:[#allocation8 + $0x630] sm:$0xff] %v1434
    %1691 = vst [vmem:[#allocation8 + $0x638] sm:$0xff] %v1435
    %1692 = vst [vmem:[#allocation8 + $0x640] sm:$0xff] %v1436
    %1693 = vst [vmem:[#allocation8 + $0x648] sm:$0xff] %v1437
    %1694 = vst [vmem:[#allocation8 + $0x650] sm:$0xff] %v1438
    %1695 = vst [vmem:[#allocation8 + $0x658] sm:$0xff] %v1439
    %1696 = vst [vmem:[#allocation8 + $0x660] sm:$0xff] %v1440
    %1697 = vst [vmem:[#allocation8 + $0x668] sm:$0xff] %v1441
    %1698 = vst [vmem:[#allocation8 + $0x670] sm:$0xff] %v1442
    %1699 = vst [vmem:[#allocation8 + $0x678] sm:$0xff] %v1443
    %1700 = vst [vmem:[#allocation8 + $0x680] sm:$0xff] %v1444
    %1701 = vst [vmem:[#allocation8 + $0x688] sm:$0xff] %v1445
    %1702 = vst [vmem:[#allocation8 + $0x690] sm:$0xff] %v1446
    %1703 = vst [vmem:[#allocation8 + $0x698] sm:$0xff] %v1447
    %1704 = vst [vmem:[#allocation8 + $0x6a0] sm:$0xff] %v1448
    %1705 = vst [vmem:[#allocation8 + $0x6a8] sm:$0xff] %v1449
    %1706 = vst [vmem:[#allocation8 + $0x6b0] sm:$0xff] %v1450
    %1707 = vst [vmem:[#allocation8 + $0x6b8] sm:$0xff] %v1451
    %1708 = vst [vmem:[#allocation8 + $0x6c0] sm:$0xff] %v1452
    %1709 = vst [vmem:[#allocation8 + $0x6c8] sm:$0xff] %v1453
    %1710 = vst [vmem:[#allocation8 + $0x6d0] sm:$0xff] %v1454
    %1711 = vst [vmem:[#allocation8 + $0x6d8] sm:$0xff] %v1455
    %1712 = vst [vmem:[#allocation8 + $0x6e0] sm:$0xff] %v1456
    %1713 = vst [vmem:[#allocation8 + $0x6e8] sm:$0xff] %v1457
    %1714 = vst [vmem:[#allocation8 + $0x6f0] sm:$0xff] %v1458
    %1715 = vst [vmem:[#allocation8 + $0x6f8] sm:$0xff] %v1459
    %1716 = vst [vmem:[#allocation8 + $0x700] sm:$0xff] %v1460
    %1717 = vst [vmem:[#allocation8 + $0x708] sm:$0xff] %v1461
    %1718 = vst [vmem:[#allocation8 + $0x710] sm:$0xff] %v1462
    %1719 = vst [vmem:[#allocation8 + $0x718] sm:$0xff] %v1463
    %1720 = vst [vmem:[#allocation8 + $0x720] sm:$0xff] %v1464
    %1721 = vst [vmem:[#allocation8 + $0x728] sm:$0xff] %v1465
    %1722 = vst [vmem:[#allocation8 + $0x730] sm:$0xff] %v1466
    %1723 = vst [vmem:[#allocation8 + $0x738] sm:$0xff] %v1467
    %1724 = vst [vmem:[#allocation8 + $0x740] sm:$0xff] %v1468
    %1725 = vst [vmem:[#allocation8 + $0x748] sm:$0xff] %v1469
    %1726 = vst [vmem:[#allocation8 + $0x750] sm:$0xff] %v1470
    %1727 = vst [vmem:[#allocation8 + $0x758] sm:$0xff] %v1471
    %1728 = vst [vmem:[#allocation8 + $0x760] sm:$0xff] %v1472
    %1729 = vst [vmem:[#allocation8 + $0x768] sm:$0xff] %v1473
    %1730 = vst [vmem:[#allocation8 + $0x770] sm:$0xff] %v1474
    %1731 = vst [vmem:[#allocation8 + $0x778] sm:$0xff] %v1475
    %1732 = vst [vmem:[#allocation8 + $0x780] sm:$0xff] %v1476
    %1733 = vst [vmem:[#allocation8 + $0x788] sm:$0xff] %v1477
    %1734 = vst [vmem:[#allocation8 + $0x790] sm:$0xff] %v1478
    %1735 = vst [vmem:[#allocation8 + $0x798] sm:$0xff] %v1479
    %1736 = vst [vmem:[#allocation8 + $0x7a0] sm:$0xff] %v1480
    %1737 = vst [vmem:[#allocation8 + $0x7a8] sm:$0xff] %v1481
    %1738 = vst [vmem:[#allocation8 + $0x7b0] sm:$0xff] %v1482
    %1739 = vst [vmem:[#allocation8 + $0x7b8] sm:$0xff] %v1483
    %1740 = vst [vmem:[#allocation8 + $0x7c0] sm:$0xff] %v1484
    %1741 = vst [vmem:[#allocation8 + $0x7c8] sm:$0xff] %v1485
    %1742 = vst [vmem:[#allocation8 + $0x7d0] sm:$0xff] %v1486
    %1743 = vst [vmem:[#allocation8 + $0x7d8] sm:$0xff] %v1487
    %1744 = vst [vmem:[#allocation8 + $0x7e0] sm:$0xff] %v1488
    %1745 = vst [vmem:[#allocation8 + $0x7e8] sm:$0xff] %v1489
    %1746 = vst [vmem:[#allocation8 + $0x7f0] sm:$0xff] %v1490
    %1747 = vst [vmem:[#allocation8 + $0x7f8] sm:$0xff] %v1491
    // Predicated region
    $region26: #{tpu_custom_call.1} parent=1 // pred_check
      _
    $region27: #{tpu_custom_call.1} parent=1 // pred_check_branch
      %1749 = sbr.rel (0) target = $region29
    $region28: #{tpu_custom_call.1} parent=1 // pred_region
      %s1751 = ssub.s32 32768, 32768
      %1752 = vsyncadd [#allocation4], %s1751
      %s1753 = sshll.u32 [#allocation8], 4
      %s1754 = int_to_ptr.vmem [resolvable:$true] %s1753
      %1759 = dma.vmem_to_hbm [thread:$0]  %s1754, 32768, %s3, [#allocation4], 8192, 8192, 512
    $region29: #{tpu_custom_call.1} parent=1 // pred_fallthru
      _
    // Predicated region
    $region30: #{tpu_custom_call.1} parent=1 // pred_check
      _
    $region31: #{tpu_custom_call.1} parent=1 // pred_check_branch
      %1761 = sbr.rel (0) target = $region33
    $region32: #{tpu_custom_call.1} parent=1 // pred_region
      %1762 = dma.done [#allocation4], 32768
    $region33: #{tpu_custom_call.1} parent=1 // pred_fallthru
      _
    %1763 = vsyncpa [#allocation3], 1
    %1764 = vsyncpa [#allocation6], 1
    %1765 = vsyncpa [#allocation4], 1

</llo_original>
